<compile_context>
chip_gen: v5e
topology: v5e:2x2
jax: 0.10.0
libtpu: 0.0.40
codegen_flags: <defaults>
</compile_context>

<pallas_src>
import functools
import math
from typing import NamedTuple, Optional

import jax
import jax.numpy as jnp
from jax.experimental import pallas as pl
from jax.experimental.pallas import tpu as pltpu


class PackedQuantizedTensor(NamedTuple):
    quantized_x: jax.Array   # (..., in_features)  integer-valued codes, fp-stored
    scales_x: jax.Array      # (..., 1)            per-token scale


def _round_up(x: int, m: int) -> int:
    return (x + m - 1) // m * m


def _pick_k_chunk(num_groups: int, group_size: int, target_elems: int):
    """Pick groups-per-K-step (gps) and group-axis padding.

    Guarantees tk = gps * group_size is lane aligned (multiple of 128) or equals full K, stays
    close to `target_elems`, and never degrades to a tiny chunk for awkward group counts
    (review hardening: pad the group axis instead of shrinking the chunk).
    """
    K = num_groups * group_size
    if K <= target_elems:
        return num_groups, 0                       # single full-K chunk
    cap = max(1, target_elems // group_size)
    best = 0
    for d in range(cap, 0, -1):                    # largest lane-aligned divisor <= cap
        if num_groups % d == 0 and (d * group_size) % 128 == 0:
            best = d
            break
    if best and best * group_size >= min(256, K):
        return best, 0
    # Divisor search degraded (e.g. prime num_groups): pad the group axis instead.
    gps = cap
    while (gps * group_size) % 128 != 0 and gps < num_groups:
        gps += 1
    if (gps * group_size) % 128 != 0:
        return num_groups, 0                       # last resort: one full-K chunk
    return gps, (-num_groups) % gps


def _pick_tn(n_pad: int, candidates, min_blocks: int) -> int:
    for c in candidates:
        if n_pad % c == 0 and n_pad // c >= min_blocks:
            return c
    return min(n_pad, 128)


def _quarot_linear_kernel(*refs, group_size: int, groups_per_step: int,
                          has_offset: bool, has_bias: bool):
    """One (tm, tn) output tile, accumulated over the K (group-chunk) grid axis.

    Each K-step: dequantize the (tk, tn) weight block into a bf16 VMEM scratch (VPU, O(tk*tn)),
    then one full-depth MXU matmul with f32 accumulation.  Per-token scale / bias applied in
    the epilogue on the last K-step.
    """
    it = iter(refs)
    xq_ref = next(it)                               # (tm, tk)       bf16 quantized activations
    wq_ref = next(it)                               # (tk, tn)       bf16 quantized weight (K, N layout)
    ws_ref = next(it)                               # (1, gps, tn)   f32  weight scales (per K-step slice)
    co_ref = next(it) if has_offset else None       # (1, gps, tn)   f32  weight_scales * offset
    xs_ref = next(it)                               # (tm, 1)        f32  per-token activation scales
    b_ref = next(it) if has_bias else None          # (1, tn)        f32  bias
    o_ref = next(it)                                # (tm, tn)       output
    wdq_ref = next(it)                              # (tk, tn)       bf16 dequantized weight scratch
    acc_ref = next(it)                              # (tm, tn)       f32  accumulator scratch

    k_step = pl.program_id(2)

    @pl.when(k_step == 0)
    def _init():
        acc_ref[...] = jnp.zeros_like(acc_ref)

    # Dequantize the weight block once per K-step (static unroll over the groups in the chunk).
    for gi in range(groups_per_step):
        rows = slice(gi * group_size, (gi + 1) * group_size)
        wd = wq_ref[rows, :].astype(jnp.float32) * ws_ref[0, gi:gi + 1, :]   # (gs, tn) * (1, tn)
        if has_offset:
            wd = wd - co_ref[0, gi:gi + 1, :]
        wdq_ref[rows, :] = wd.astype(wdq_ref.dtype)

    # Single wide-K bf16 MXU matmul with f32 accumulation; accumulator touched once per K-step.
    acc_ref[...] += jnp.dot(xq_ref[...], wdq_ref[...], preferred_element_type=jnp.float32)

    @pl.when(k_step == pl.num_programs(2) - 1)
    def _finalize():
        out = acc_ref[...] * xs_ref[...]            # per-token scale in the epilogue
        if has_bias:
            out = out + b_ref[...]
        o_ref[...] = out.astype(o_ref.dtype)


def quarot_fp16_linear(x: PackedQuantizedTensor,
                       weight: jax.Array,                     # (out_features, in_features)
                       weight_scales: jax.Array,              # (out_features, in_features // group_size)
                       offset: Optional[jax.Array] = None,    # (out_features, groups) or None
                       bias: Optional[jax.Array] = None,      # (out_features,) or None
                       *,
                       group_size: int) -> jax.Array:
    xq, xs = x.quantized_x, x.scales_x
    *lead, K = xq.shape
    M = math.prod(lead) if lead else 1
    N, k_w = weight.shape
    assert k_w == K, (k_w, K)
    assert K % group_size == 0
    G = K // group_size
    has_offset = offset is not None
    has_bias = bias is not None
    out_dtype = xq.dtype

    # ---------------- tile sizes ----------------
    N_pad = _round_up(N, 128)
    decode = M < 128
    if decode:
        tm, M_pad = M, M                            # tiny full-height tile (fits trivially)
        k_target = 2048                             # decode is HBM-weight bound: big chunks
        tn = _pick_tn(N_pad, (1024, 512, 256, 128), min_blocks=2)   # keep >=2 N blocks (v7x megacore)
    else:
        tm = 256 if M >= 512 else 128
        M_pad = _round_up(M, tm)                    # pad tokens instead of a full-height tile
        k_target = 512
        tn = 256 if N_pad % 256 == 0 else 128

    gps, pad_g = _pick_k_chunk(G, group_size, k_target)
    G_pad = G + pad_g
    tk = gps * group_size
    K_pad = G_pad * group_size
    k_steps = G_pad // gps
    # TODO(synk): when group_size == in_features and K is very large, tk == K (whole-group
    #             chunk); sub-group K chunking would need a scale-broadcast tweak.

    # ---------------- operand layout (one-time wrapper work) ----------------
    xq2 = xq.reshape(M, K).astype(jnp.bfloat16)                # (M, K), lane-dense K
    xs2 = xs.reshape(M, 1).astype(jnp.float32)                 # (M, 1)
    wq_t = weight.astype(jnp.bfloat16).T                       # (K, N), lane-dense N
    ws_t = weight_scales.astype(jnp.float32).T                 # (G, N)
    co_t = ((weight_scales.astype(jnp.float32) * offset.astype(jnp.float32)).T
            if has_offset else None)                           # (G, N) = scales * offset
    b2 = bias.astype(jnp.float32).reshape(1, N) if has_bias else None

    if M_pad != M:
        xq2 = jnp.pad(xq2, ((0, M_pad - M), (0, 0)))
        xs2 = jnp.pad(xs2, ((0, M_pad - M), (0, 0)))
    if K_pad != K:                                             # padded groups contribute zero
        xq2 = jnp.pad(xq2, ((0, 0), (0, K_pad - K)))
        wq_t = jnp.pad(wq_t, ((0, K_pad - K), (0, 0)))
        ws_t = jnp.pad(ws_t, ((0, pad_g), (0, 0)))
        if has_offset:
            co_t = jnp.pad(co_t, ((0, pad_g), (0, 0)))
    if N_pad != N:
        wq_t = jnp.pad(wq_t, ((0, 0), (0, N_pad - N)))
        ws_t = jnp.pad(ws_t, ((0, 0), (0, N_pad - N)))
        if has_offset:
            co_t = jnp.pad(co_t, ((0, 0), (0, N_pad - N)))
        if has_bias:
            b2 = jnp.pad(b2, ((0, 0), (0, N_pad - N)))

    # Per-K-step layout for scales so the kernel indexes them statically (no dynamic slicing).
    ws3 = ws_t.reshape(k_steps, gps, N_pad)
    co3 = co_t.reshape(k_steps, gps, N_pad) if has_offset else None

    grid = (M_pad // tm, N_pad // tn, k_steps)
    total_steps = grid[0] * grid[1] * grid[2]
    w_pipe = pl.Buffered(3) if (decode and total_steps >= 3) else None

    inputs = [xq2, wq_t, ws3]
    in_specs = [
        pl.BlockSpec((tm, tk), lambda i, j, k: (i, k)),                    # quantized activations
        pl.BlockSpec((tk, tn), lambda i, j, k: (k, j), pipeline_mode=w_pipe),   # quantized weight
        pl.BlockSpec((1, gps, tn), lambda i, j, k: (k, 0, j)),             # weight scales
    ]
    if has_offset:
        inputs.append(co3)
        in_specs.append(pl.BlockSpec((1, gps, tn), lambda i, j, k: (k, 0, j)))
    inputs.append(xs2)
    in_specs.append(pl.BlockSpec((tm, 1), lambda i, j, k: (i, 0)))
    if has_bias:
        inputs.append(b2)
        in_specs.append(pl.BlockSpec((1, tn), lambda i, j, k: (0, j)))

    m_tiles, n_tiles = grid[0], grid[1]
    cost = pl.CostEstimate(
        flops=2 * M * K * N,
        transcendentals=0,
        bytes_accessed=(xq2.size * 2 * n_tiles        # activations re-streamed per N tile
                        + wq_t.size * 2 * m_tiles     # weight re-streamed per M tile
                        + M_pad * N_pad * 2))         # output written once

    out = pl.pallas_call(
        functools.partial(_quarot_linear_kernel,
                          group_size=group_size,
                          groups_per_step=gps,
                          has_offset=has_offset,
                          has_bias=has_bias),
        out_shape=jax.ShapeDtypeStruct((M_pad, N_pad), out_dtype),
        grid_spec=pltpu.PrefetchScalarGridSpec(
            num_scalar_prefetch=0,
            grid=grid,
            in_specs=in_specs,
            out_specs=pl.BlockSpec((tm, tn), lambda i, j, k: (i, j)),
            scratch_shapes=[pltpu.VMEM((tk, tn), jnp.bfloat16),     # dequantized weight tile
                            pltpu.VMEM((tm, tn), jnp.float32)],     # f32 accumulator
        ),
        compiler_params=pltpu.CompilerParams(
            dimension_semantics=("parallel", "parallel", "arbitrary")),
        cost_estimate=cost,
    )(*inputs)

    if M_pad != M or N_pad != N:
        out = out[:M, :N]
    return out.reshape(*lead, N)


def _reference(x: PackedQuantizedTensor, weight, weight_scales, offset, bias, group_size):
    """Pure-JAX f32 reference mirroring the torch module."""
    xd = x.quantized_x.astype(jnp.float32) * x.scales_x.astype(jnp.float32)
    out_features, in_features = weight.shape
    g = in_features // group_size
    wq = weight.astype(jnp.float32).reshape(out_features, g, group_size)
    off = (jnp.zeros((out_features, g), jnp.float32) if offset is None
           else offset.astype(jnp.float32))
    W = ((wq - off[:, :, None]) * weight_scales.astype(jnp.float32)[:, :, None]
         ).reshape(out_features, in_features)
    y = jnp.einsum("...k,ok->...o", xd, W)
    if bias is not None:
        y = y + bias.astype(jnp.float32)
    return y


if __name__ == "__main__":
    # Small shapes consistent with the module: tokens = batch * seq, hidden dims.
    B, S = 2, 8
    IN_FEATURES, OUT_FEATURES, GROUP_SIZE = 1024, 512, 128    # -> 8 groups, 2 N-tiles
    dtype = jnp.bfloat16

    key = jax.random.PRNGKey(0)
    k1, k2, k3, k4, k5, k6 = jax.random.split(key, 6)

    # Deterministic "quantized" inputs / buffers (integer-valued, FP-stored).
    xq = jnp.round(jax.random.normal(k1, (B, S, IN_FEATURES)) * 4.0).astype(dtype)
    xs = (jax.random.uniform(k2, (B, S, 1)) * 0.05 + 0.01).astype(dtype)
    weight = jnp.round(jax.random.normal(k3, (OUT_FEATURES, IN_FEATURES)) * 4.0).astype(dtype)
    weight_scales = (jax.random.uniform(k4, (OUT_FEATURES, IN_FEATURES // GROUP_SIZE))
                     * 0.02 + 0.005).astype(dtype)
    offset = jnp.round(jax.random.normal(k5, (OUT_FEATURES, IN_FEATURES // GROUP_SIZE))).astype(dtype)
    bias = (jax.random.normal(k6, (OUT_FEATURES,)) * 0.1).astype(dtype)

    x_packed = PackedQuantizedTensor(quantized_x=xq, scales_x=xs)

    # Full path: offset + bias.
    y = quarot_fp16_linear(x_packed, weight, weight_scales, offset, bias,
                           group_size=GROUP_SIZE)
    y = jax.block_until_ready(y)
    y_ref = _reference(x_packed, weight, weight_scales, offset, bias, GROUP_SIZE)
    assert y.shape == (B, S, OUT_FEATURES), y.shape
    assert y.dtype == dtype, y.dtype
    assert jnp.allclose(y.astype(jnp.float32), y_ref, rtol=3e-2, atol=3e-2), (
        float(jnp.max(jnp.abs(y.astype(jnp.float32) - y_ref))))

    # Default module config: offset=None, bias=None (specialized kernel, fewer inputs).
    y2 = quarot_fp16_linear(x_packed, weight, weight_scales, None, None,
                            group_size=GROUP_SIZE)
    y2 = jax.block_until_ready(y2)
    y2_ref = _reference(x_packed, weight, weight_scales, None, None, GROUP_SIZE)
    assert jnp.allclose(y2.astype(jnp.float32), y2_ref, rtol=3e-2, atol=3e-2), (
        float(jnp.max(jnp.abs(y2.astype(jnp.float32) - y2_ref))))

    print("KERNEL_OK")
</pallas_src>

<mosaic_0001>
module attributes {stable_mosaic.version = 11 : i64} {
  func.func @_quarot_linear_kernel(%arg0: i32, %arg1: i32, %arg2: i32, %arg3: memref<16x1024xbf16, #tpu.memory_space<vmem>>, %arg4: memref<1024x256xbf16, #tpu.memory_space<vmem>>, %arg5: memref<1x8x256xf32, #tpu.memory_space<vmem>>, %arg6: memref<1x8x256xf32, #tpu.memory_space<vmem>>, %arg7: memref<16x1xf32, #tpu.memory_space<vmem>>, %arg8: memref<1x256xf32, #tpu.memory_space<vmem>>, %arg9: memref<16x256xbf16, #tpu.memory_space<vmem>>, %arg10: memref<1024x256xbf16, #tpu.memory_space<vmem>>, %arg11: memref<16x256xf32, #tpu.memory_space<vmem>>) attributes {dimension_semantics = [#tpu.dimension_semantics<parallel>, #tpu.dimension_semantics<parallel>, #tpu.dimension_semantics<arbitrary>], iteration_bounds = array<i64: 1, 2, 1>, scalar_prefetch = 0 : i64, scratch_operands = 2 : i64, tpu.core_type = #tpu.core_type<tc>, window_params = [{transform_indices = @transform_0, window_bounds = array<i64: 16, 1024>}, {transform_indices = @transform_1, window_bounds = array<i64: 1024, 256>}, {transform_indices = @transform_2, window_bounds = array<i64: 1, 8, 256>}, {transform_indices = @transform_3, window_bounds = array<i64: 1, 8, 256>}, {transform_indices = @transform_4, window_bounds = array<i64: 16, 1>}, {transform_indices = @transform_5, window_bounds = array<i64: 1, 256>}, {transform_indices = @transform_6, window_bounds = array<i64: 16, 256>}]} {
    %c0_i32 = arith.constant 0 : i32
    %0 = arith.cmpi eq, %arg2, %c0_i32 : i32
    %1 = arith.extui %0 : i1 to i32
    %c0_i32_0 = arith.constant 0 : i32
    %2 = arith.cmpi ne, %1, %c0_i32_0 : i32
    scf.if %2 {
      %cst_76 = arith.constant 0.000000e+00 : f32
      %108 = vector.broadcast %cst_76 : f32 to vector<16x256xf32>
      %c0_77 = arith.constant 0 : index
      %c0_78 = arith.constant 0 : index
      %109 = vector.load %arg11[%c0_77, %c0_78] : memref<16x256xf32, #tpu.memory_space<vmem>>, vector<16x256xf32>
      tpu.vector_store %arg11[%c0_77, %c0_78], %108 {strides = array<i32>} : memref<16x256xf32, #tpu.memory_space<vmem>>, vector<16x256xf32>,
    } else {
    }
    %c0 = arith.constant 0 : index
    %c0_1 = arith.constant 0 : index
    %3 = vector.load %arg4[%c0, %c0_1] : memref<1024x256xbf16, #tpu.memory_space<vmem>>, vector<128x256xbf16>
    %4 = arith.extf %3 : vector<128x256xbf16> to vector<128x256xf32>
    %c0_2 = arith.constant 0 : index
    %c0_3 = arith.constant 0 : index
    %c0_4 = arith.constant 0 : index
    %5 = vector.load %arg5[%c0_2, %c0_3, %c0_4] : memref<1x8x256xf32, #tpu.memory_space<vmem>>, vector<1x1x256xf32>
    %6 = vector.shape_cast %5 : vector<1x1x256xf32> to vector<1x256xf32>
    %7 = vector.broadcast %6 : vector<1x256xf32> to vector<128x256xf32>
    %8 = arith.mulf %4, %7 : vector<128x256xf32>
    %c0_5 = arith.constant 0 : index
    %c0_6 = arith.constant 0 : index
    %c0_7 = arith.constant 0 : index
    %9 = vector.load %arg6[%c0_5, %c0_6, %c0_7] : memref<1x8x256xf32, #tpu.memory_space<vmem>>, vector<1x1x256xf32>
    %10 = vector.shape_cast %9 : vector<1x1x256xf32> to vector<1x256xf32>
    %11 = vector.broadcast %10 : vector<1x256xf32> to vector<128x256xf32>
    %12 = arith.subf %8, %11 : vector<128x256xf32>
    %13 = arith.truncf %12 : vector<128x256xf32> to vector<128x256xbf16>
    %c0_8 = arith.constant 0 : index
    %c0_9 = arith.constant 0 : index
    %14 = vector.load %arg10[%c0_8, %c0_9] : memref<1024x256xbf16, #tpu.memory_space<vmem>>, vector<128x256xbf16>
    tpu.vector_store %arg10[%c0_8, %c0_9], %13 {strides = array<i32>} : memref<1024x256xbf16, #tpu.memory_space<vmem>>, vector<128x256xbf16>,
    %c128 = arith.constant 128 : index
    %c0_10 = arith.constant 0 : index
    %15 = vector.load %arg4[%c128, %c0_10] : memref<1024x256xbf16, #tpu.memory_space<vmem>>, vector<128x256xbf16>
    %16 = arith.extf %15 : vector<128x256xbf16> to vector<128x256xf32>
    %c0_11 = arith.constant 0 : index
    %c1 = arith.constant 1 : index
    %c0_12 = arith.constant 0 : index
    %17 = vector.load %arg5[%c0_11, %c1, %c0_12] : memref<1x8x256xf32, #tpu.memory_space<vmem>>, vector<1x1x256xf32>
    %18 = vector.shape_cast %17 : vector<1x1x256xf32> to vector<1x256xf32>
    %19 = vector.broadcast %18 : vector<1x256xf32> to vector<128x256xf32>
    %20 = arith.mulf %16, %19 : vector<128x256xf32>
    %c0_13 = arith.constant 0 : index
    %c1_14 = arith.constant 1 : index
    %c0_15 = arith.constant 0 : index
    %21 = vector.load %arg6[%c0_13, %c1_14, %c0_15] : memref<1x8x256xf32, #tpu.memory_space<vmem>>, vector<1x1x256xf32>
    %22 = vector.shape_cast %21 : vector<1x1x256xf32> to vector<1x256xf32>
    %23 = vector.broadcast %22 : vector<1x256xf32> to vector<128x256xf32>
    %24 = arith.subf %20, %23 : vector<128x256xf32>
    %25 = arith.truncf %24 : vector<128x256xf32> to vector<128x256xbf16>
    %c128_16 = arith.constant 128 : index
    %c0_17 = arith.constant 0 : index
    %26 = vector.load %arg10[%c128_16, %c0_17] : memref<1024x256xbf16, #tpu.memory_space<vmem>>, vector<128x256xbf16>
    tpu.vector_store %arg10[%c128_16, %c0_17], %25 {strides = array<i32>} : memref<1024x256xbf16, #tpu.memory_space<vmem>>, vector<128x256xbf16>,
    %c256 = arith.constant 256 : index
    %c0_18 = arith.constant 0 : index
    %27 = vector.load %arg4[%c256, %c0_18] : memref<1024x256xbf16, #tpu.memory_space<vmem>>, vector<128x256xbf16>
    %28 = arith.extf %27 : vector<128x256xbf16> to vector<128x256xf32>
    %c0_19 = arith.constant 0 : index
    %c2 = arith.constant 2 : index
    %c0_20 = arith.constant 0 : index
    %29 = vector.load %arg5[%c0_19, %c2, %c0_20] : memref<1x8x256xf32, #tpu.memory_space<vmem>>, vector<1x1x256xf32>
    %30 = vector.shape_cast %29 : vector<1x1x256xf32> to vector<1x256xf32>
    %31 = vector.broadcast %30 : vector<1x256xf32> to vector<128x256xf32>
    %32 = arith.mulf %28, %31 : vector<128x256xf32>
    %c0_21 = arith.constant 0 : index
    %c2_22 = arith.constant 2 : index
    %c0_23 = arith.constant 0 : index
    %33 = vector.load %arg6[%c0_21, %c2_22, %c0_23] : memref<1x8x256xf32, #tpu.memory_space<vmem>>, vector<1x1x256xf32>
    %34 = vector.shape_cast %33 : vector<1x1x256xf32> to vector<1x256xf32>
    %35 = vector.broadcast %34 : vector<1x256xf32> to vector<128x256xf32>
    %36 = arith.subf %32, %35 : vector<128x256xf32>
    %37 = arith.truncf %36 : vector<128x256xf32> to vector<128x256xbf16>
    %c256_24 = arith.constant 256 : index
    %c0_25 = arith.constant 0 : index
    %38 = vector.load %arg10[%c256_24, %c0_25] : memref<1024x256xbf16, #tpu.memory_space<vmem>>, vector<128x256xbf16>
    tpu.vector_store %arg10[%c256_24, %c0_25], %37 {strides = array<i32>} : memref<1024x256xbf16, #tpu.memory_space<vmem>>, vector<128x256xbf16>,
    %c384 = arith.constant 384 : index
    %c0_26 = arith.constant 0 : index
    %39 = vector.load %arg4[%c384, %c0_26] : memref<1024x256xbf16, #tpu.memory_space<vmem>>, vector<128x256xbf16>
    %40 = arith.extf %39 : vector<128x256xbf16> to vector<128x256xf32>
    %c0_27 = arith.constant 0 : index
    %c3 = arith.constant 3 : index
    %c0_28 = arith.constant 0 : index
    %41 = vector.load %arg5[%c0_27, %c3, %c0_28] : memref<1x8x256xf32, #tpu.memory_space<vmem>>, vector<1x1x256xf32>
    %42 = vector.shape_cast %41 : vector<1x1x256xf32> to vector<1x256xf32>
    %43 = vector.broadcast %42 : vector<1x256xf32> to vector<128x256xf32>
    %44 = arith.mulf %40, %43 : vector<128x256xf32>
    %c0_29 = arith.constant 0 : index
    %c3_30 = arith.constant 3 : index
    %c0_31 = arith.constant 0 : index
    %45 = vector.load %arg6[%c0_29, %c3_30, %c0_31] : memref<1x8x256xf32, #tpu.memory_space<vmem>>, vector<1x1x256xf32>
    %46 = vector.shape_cast %45 : vector<1x1x256xf32> to vector<1x256xf32>
    %47 = vector.broadcast %46 : vector<1x256xf32> to vector<128x256xf32>
    %48 = arith.subf %44, %47 : vector<128x256xf32>
    %49 = arith.truncf %48 : vector<128x256xf32> to vector<128x256xbf16>
    %c384_32 = arith.constant 384 : index
    %c0_33 = arith.constant 0 : index
    %50 = vector.load %arg10[%c384_32, %c0_33] : memref<1024x256xbf16, #tpu.memory_space<vmem>>, vector<128x256xbf16>
    tpu.vector_store %arg10[%c384_32, %c0_33], %49 {strides = array<i32>} : memref<1024x256xbf16, #tpu.memory_space<vmem>>, vector<128x256xbf16>,
    %c512 = arith.constant 512 : index
    %c0_34 = arith.constant 0 : index
    %51 = vector.load %arg4[%c512, %c0_34] : memref<1024x256xbf16, #tpu.memory_space<vmem>>, vector<128x256xbf16>
    %52 = arith.extf %51 : vector<128x256xbf16> to vector<128x256xf32>
    %c0_35 = arith.constant 0 : index
    %c4 = arith.constant 4 : index
    %c0_36 = arith.constant 0 : index
    %53 = vector.load %arg5[%c0_35, %c4, %c0_36] : memref<1x8x256xf32, #tpu.memory_space<vmem>>, vector<1x1x256xf32>
    %54 = vector.shape_cast %53 : vector<1x1x256xf32> to vector<1x256xf32>
    %55 = vector.broadcast %54 : vector<1x256xf32> to vector<128x256xf32>
    %56 = arith.mulf %52, %55 : vector<128x256xf32>
    %c0_37 = arith.constant 0 : index
    %c4_38 = arith.constant 4 : index
    %c0_39 = arith.constant 0 : index
    %57 = vector.load %arg6[%c0_37, %c4_38, %c0_39] : memref<1x8x256xf32, #tpu.memory_space<vmem>>, vector<1x1x256xf32>
    %58 = vector.shape_cast %57 : vector<1x1x256xf32> to vector<1x256xf32>
    %59 = vector.broadcast %58 : vector<1x256xf32> to vector<128x256xf32>
    %60 = arith.subf %56, %59 : vector<128x256xf32>
    %61 = arith.truncf %60 : vector<128x256xf32> to vector<128x256xbf16>
    %c512_40 = arith.constant 512 : index
    %c0_41 = arith.constant 0 : index
    %62 = vector.load %arg10[%c512_40, %c0_41] : memref<1024x256xbf16, #tpu.memory_space<vmem>>, vector<128x256xbf16>
    tpu.vector_store %arg10[%c512_40, %c0_41], %61 {strides = array<i32>} : memref<1024x256xbf16, #tpu.memory_space<vmem>>, vector<128x256xbf16>,
    %c640 = arith.constant 640 : index
    %c0_42 = arith.constant 0 : index
    %63 = vector.load %arg4[%c640, %c0_42] : memref<1024x256xbf16, #tpu.memory_space<vmem>>, vector<128x256xbf16>
    %64 = arith.extf %63 : vector<128x256xbf16> to vector<128x256xf32>
    %c0_43 = arith.constant 0 : index
    %c5 = arith.constant 5 : index
    %c0_44 = arith.constant 0 : index
    %65 = vector.load %arg5[%c0_43, %c5, %c0_44] : memref<1x8x256xf32, #tpu.memory_space<vmem>>, vector<1x1x256xf32>
    %66 = vector.shape_cast %65 : vector<1x1x256xf32> to vector<1x256xf32>
    %67 = vector.broadcast %66 : vector<1x256xf32> to vector<128x256xf32>
    %68 = arith.mulf %64, %67 : vector<128x256xf32>
    %c0_45 = arith.constant 0 : index
    %c5_46 = arith.constant 5 : index
    %c0_47 = arith.constant 0 : index
    %69 = vector.load %arg6[%c0_45, %c5_46, %c0_47] : memref<1x8x256xf32, #tpu.memory_space<vmem>>, vector<1x1x256xf32>
    %70 = vector.shape_cast %69 : vector<1x1x256xf32> to vector<1x256xf32>
    %71 = vector.broadcast %70 : vector<1x256xf32> to vector<128x256xf32>
    %72 = arith.subf %68, %71 : vector<128x256xf32>
    %73 = arith.truncf %72 : vector<128x256xf32> to vector<128x256xbf16>
    %c640_48 = arith.constant 640 : index
    %c0_49 = arith.constant 0 : index
    %74 = vector.load %arg10[%c640_48, %c0_49] : memref<1024x256xbf16, #tpu.memory_space<vmem>>, vector<128x256xbf16>
    tpu.vector_store %arg10[%c640_48, %c0_49], %73 {strides = array<i32>} : memref<1024x256xbf16, #tpu.memory_space<vmem>>, vector<128x256xbf16>,
    %c768 = arith.constant 768 : index
    %c0_50 = arith.constant 0 : index
    %75 = vector.load %arg4[%c768, %c0_50] : memref<1024x256xbf16, #tpu.memory_space<vmem>>, vector<128x256xbf16>
    %76 = arith.extf %75 : vector<128x256xbf16> to vector<128x256xf32>
    %c0_51 = arith.constant 0 : index
    %c6 = arith.constant 6 : index
    %c0_52 = arith.constant 0 : index
    %77 = vector.load %arg5[%c0_51, %c6, %c0_52] : memref<1x8x256xf32, #tpu.memory_space<vmem>>, vector<1x1x256xf32>
    %78 = vector.shape_cast %77 : vector<1x1x256xf32> to vector<1x256xf32>
    %79 = vector.broadcast %78 : vector<1x256xf32> to vector<128x256xf32>
    %80 = arith.mulf %76, %79 : vector<128x256xf32>
    %c0_53 = arith.constant 0 : index
    %c6_54 = arith.constant 6 : index
    %c0_55 = arith.constant 0 : index
    %81 = vector.load %arg6[%c0_53, %c6_54, %c0_55] : memref<1x8x256xf32, #tpu.memory_space<vmem>>, vector<1x1x256xf32>
    %82 = vector.shape_cast %81 : vector<1x1x256xf32> to vector<1x256xf32>
    %83 = vector.broadcast %82 : vector<1x256xf32> to vector<128x256xf32>
    %84 = arith.subf %80, %83 : vector<128x256xf32>
    %85 = arith.truncf %84 : vector<128x256xf32> to vector<128x256xbf16>
    %c768_56 = arith.constant 768 : index
    %c0_57 = arith.constant 0 : index
    %86 = vector.load %arg10[%c768_56, %c0_57] : memref<1024x256xbf16, #tpu.memory_space<vmem>>, vector<128x256xbf16>
    tpu.vector_store %arg10[%c768_56, %c0_57], %85 {strides = array<i32>} : memref<1024x256xbf16, #tpu.memory_space<vmem>>, vector<128x256xbf16>,
    %c896 = arith.constant 896 : index
    %c0_58 = arith.constant 0 : index
    %87 = vector.load %arg4[%c896, %c0_58] : memref<1024x256xbf16, #tpu.memory_space<vmem>>, vector<128x256xbf16>
    %88 = arith.extf %87 : vector<128x256xbf16> to vector<128x256xf32>
    %c0_59 = arith.constant 0 : index
    %c7 = arith.constant 7 : index
    %c0_60 = arith.constant 0 : index
    %89 = vector.load %arg5[%c0_59, %c7, %c0_60] : memref<1x8x256xf32, #tpu.memory_space<vmem>>, vector<1x1x256xf32>
    %90 = vector.shape_cast %89 : vector<1x1x256xf32> to vector<1x256xf32>
    %91 = vector.broadcast %90 : vector<1x256xf32> to vector<128x256xf32>
    %92 = arith.mulf %88, %91 : vector<128x256xf32>
    %c0_61 = arith.constant 0 : index
    %c7_62 = arith.constant 7 : index
    %c0_63 = arith.constant 0 : index
    %93 = vector.load %arg6[%c0_61, %c7_62, %c0_63] : memref<1x8x256xf32, #tpu.memory_space<vmem>>, vector<1x1x256xf32>
    %94 = vector.shape_cast %93 : vector<1x1x256xf32> to vector<1x256xf32>
    %95 = vector.broadcast %94 : vector<1x256xf32> to vector<128x256xf32>
    %96 = arith.subf %92, %95 : vector<128x256xf32>
    %97 = arith.truncf %96 : vector<128x256xf32> to vector<128x256xbf16>
    %c896_64 = arith.constant 896 : index
    %c0_65 = arith.constant 0 : index
    %98 = vector.load %arg10[%c896_64, %c0_65] : memref<1024x256xbf16, #tpu.memory_space<vmem>>, vector<128x256xbf16>
    tpu.vector_store %arg10[%c896_64, %c0_65], %97 {strides = array<i32>} : memref<1024x256xbf16, #tpu.memory_space<vmem>>, vector<128x256xbf16>,
    %c0_66 = arith.constant 0 : index
    %c0_67 = arith.constant 0 : index
    %99 = vector.load %arg11[%c0_66, %c0_67] : memref<16x256xf32, #tpu.memory_space<vmem>>, vector<16x256xf32>
    %c0_68 = arith.constant 0 : index
    %c0_69 = arith.constant 0 : index
    %100 = vector.load %arg3[%c0_68, %c0_69] : memref<16x1024xbf16, #tpu.memory_space<vmem>>, vector<16x1024xbf16>
    %c0_70 = arith.constant 0 : index
    %c0_71 = arith.constant 0 : index
    %101 = vector.load %arg10[%c0_70, %c0_71] : memref<1024x256xbf16, #tpu.memory_space<vmem>>, vector<1024x256xbf16>
    %cst = arith.constant dense<0.000000e+00> : vector<16x256xf32>
    %102 = tpu.matmul %100, %101, %cst {dimension_numbers = #tpu.dot_dimension_numbers<[1], [0], [0], [1], [0, 0, 1, 1], [], []>} : vector<16x1024xbf16>, vector<1024x256xbf16>, vector<16x256xf32> -> vector<16x256xf32>
    %103 = arith.addf %99, %102 : vector<16x256xf32>
    %c0_72 = arith.constant 0 : index
    %c0_73 = arith.constant 0 : index
    %104 = vector.load %arg11[%c0_72, %c0_73] : memref<16x256xf32, #tpu.memory_space<vmem>>, vector<16x256xf32>
    tpu.vector_store %arg11[%c0_72, %c0_73], %103 {strides = array<i32>} : memref<16x256xf32, #tpu.memory_space<vmem>>, vector<16x256xf32>,
    %c0_i32_74 = arith.constant 0 : i32
    %105 = arith.cmpi eq, %arg2, %c0_i32_74 : i32
    %106 = arith.extui %105 : i1 to i32
    %c0_i32_75 = arith.constant 0 : i32
    %107 = arith.cmpi ne, %106, %c0_i32_75 : i32
    scf.if %107 {
      %c0_76 = arith.constant 0 : index
      %c0_77 = arith.constant 0 : index
      %108 = vector.load %arg11[%c0_76, %c0_77] : memref<16x256xf32, #tpu.memory_space<vmem>>, vector<16x256xf32>
      %c0_78 = arith.constant 0 : index
      %c0_79 = arith.constant 0 : index
      %109 = vector.load %arg7[%c0_78, %c0_79] : memref<16x1xf32, #tpu.memory_space<vmem>>, vector<16x1xf32>
      %110 = vector.broadcast %109 : vector<16x1xf32> to vector<16x256xf32>
      %111 = arith.mulf %108, %110 : vector<16x256xf32>
      %c0_80 = arith.constant 0 : index
      %c0_81 = arith.constant 0 : index
      %112 = vector.load %arg8[%c0_80, %c0_81] : memref<1x256xf32, #tpu.memory_space<vmem>>, vector<1x256xf32>
      %113 = vector.broadcast %112 : vector<1x256xf32> to vector<16x256xf32>
      %114 = arith.addf %111, %113 : vector<16x256xf32>
      %115 = arith.truncf %114 : vector<16x256xf32> to vector<16x256xbf16>
      %c0_82 = arith.constant 0 : index
      %c0_83 = arith.constant 0 : index
      %116 = vector.load %arg9[%c0_82, %c0_83] : memref<16x256xbf16, #tpu.memory_space<vmem>>, vector<16x256xbf16>
      tpu.vector_store %arg9[%c0_82, %c0_83], %115 {strides = array<i32>} : memref<16x256xbf16, #tpu.memory_space<vmem>>, vector<16x256xbf16>,
    } else {
    }
    return
  }
  func.func @transform_0(%arg0: i32, %arg1: i32, %arg2: i32) -> (i32, i32) {
    %c0_i32 = arith.constant 0 : i32
    return %arg0, %arg2 : i32, i32
  }
  func.func @transform_1(%arg0: i32, %arg1: i32, %arg2: i32) -> (i32, i32) {
    %c0_i32 = arith.constant 0 : i32
    return %arg2, %arg1 : i32, i32
  }
  func.func @transform_2(%arg0: i32, %arg1: i32, %arg2: i32) -> (i32, i32, i32) {
    %c0_i32 = arith.constant 0 : i32
    %c0_i32_0 = arith.constant 0 : i32
    return %arg2, %c0_i32, %arg1 : i32, i32, i32
  }
  func.func @transform_3(%arg0: i32, %arg1: i32, %arg2: i32) -> (i32, i32, i32) {
    %c0_i32 = arith.constant 0 : i32
    %c0_i32_0 = arith.constant 0 : i32
    return %arg2, %c0_i32, %arg1 : i32, i32, i32
  }
  func.func @transform_4(%arg0: i32, %arg1: i32, %arg2: i32) -> (i32, i32) {
    %c0_i32 = arith.constant 0 : i32
    %c0_i32_0 = arith.constant 0 : i32
    return %arg0, %c0_i32 : i32, i32
  }
  func.func @transform_5(%arg0: i32, %arg1: i32, %arg2: i32) -> (i32, i32) {
    %c0_i32 = arith.constant 0 : i32
    %c0_i32_0 = arith.constant 0 : i32
    return %c0_i32, %arg1 : i32, i32
  }
  func.func @transform_6(%arg0: i32, %arg1: i32, %arg2: i32) -> (i32, i32) {
    %c0_i32 = arith.constant 0 : i32
    return %arg0, %arg1 : i32, i32
  }
}

</mosaic_0001>

<llo_original>
// kernel: tpu_custom_call.1
$region0: #{tpu_custom_call.1}
  #allocation0 [shape = 'u32[]', space=smem, size = 0x4, offset = 0x4, fixed_abs, tag = 'smem constant byte address 0x4 - core index']
  #allocation1 [shape = 'u32[72,128]{1,0:T(1,128)}', space=vmem, size = 0x9000, scoped, tag = 'internal scratch']
  #allocation2 [shape = 'bf16[1024,256]{1,0:T(8,128)(2,1)}', space=vmem, size = 0x80000, scoped, tag = 'scratch operand']
  #allocation3 [shape = 'f32[16,256]{1,0:T(8,128)}', space=vmem, size = 0x4000, scoped, tag = 'scratch operand']
  %s0 = inlined_call_operand.hbm [shape: bf16[16,1024], index: 0, kind: input, shape index: {}]
  %s1 = inlined_call_operand.hbm [shape: bf16[1024,512], index: 1, kind: input, shape index: {}]
  %s2 = inlined_call_operand.hbm [shape: f32[1,8,512], index: 2, kind: input, shape index: {}]
  %s3 = inlined_call_operand.hbm [shape: f32[1,8,512], index: 3, kind: input, shape index: {}]
  %s4 = inlined_call_operand.vmem [shape: f32[16,1], index: 4, kind: input, shape index: {}]
  %s5 = inlined_call_operand.vmem [shape: f32[1,512], index: 5, kind: input, shape index: {}]
  %s6 = inlined_call_operand.hbm [shape: bf16[16,512], index: 6, kind: output, shape index: {}]
  %s7 = sld [smem:[#allocation0]]
  $region81: #{tpu_custom_call.1} parent=0
    _
  %s9 = ssub.s32 1, %s7
  %s10 = scalar_select 0, %s9, %s7
  $region1: #{tpu_custom_call.1} parent=0
    #allocation4 [shape = 'u8[32768]{0}', space=vmem, size = 0x8000, scoped, tag = 'input window, operand 0, single buffered']
    #allocation5 [shape = 's32[2]{0}', space=sflag, size = 0x8, scoped, tag = 'scoped memory for tpu_custom_call.1']
    #allocation6 [shape = 's32[2]{0}', space=sflag, size = 0x8, scoped, tag = 'scoped memory for tpu_custom_call.1']
    #allocation7 [shape = 'u8[1048576]{0}', space=vmem, size = 0x100000, scoped, tag = 'input window, operand 1']
    #allocation8 [shape = 's32[2]{0}', space=sflag, size = 0x8, scoped, tag = 'scoped memory for tpu_custom_call.1']
    #allocation9 [shape = 'u8[16384]{0}', space=vmem, size = 0x4000, scoped, tag = 'input window, operand 2']
    #allocation10 [shape = 'u8[16384]{0}', space=vmem, size = 0x4000, scoped, tag = 'input window, operand 3']
    #allocation11 [shape = 's32[2]{0}', space=sflag, size = 0x8, scoped, tag = 'scoped memory for tpu_custom_call.1']
    #allocation12 [shape = 'u8[16384]{0}', space=vmem, size = 0x4000, scoped, tag = 'output window, operand 0']
    %11 = vsyncpa [#allocation5], 0
    %12 = vsyncpa [#allocation8], 0
    %s13 = scalar_lea.sflag [#allocation8], 1
    %14 = vsyncpa %s13, 0
    %15 = vsyncpa [#allocation11], 0
    %s16 = scalar_lea.sflag [#allocation11], 1
    %17 = vsyncpa %s16, 0
    %18 = vsyncpa [#allocation6], 0
    %s19 = scalar_lea.sflag [#allocation6], 1
    %20 = vsyncpa %s19, 0
    loop: start=0, step=1, limit=4
    $region2: #{tpu_custom_call.1} parent=1 // loop_pre_header
      _
    $region3: #{tpu_custom_call.1} parent=1 // loop_header
      %s22 = sphi 0, %s26
      %p23 = scmp.ge.s32.totalorder %s22, 4
      %s29 = sphi 0, %s48
      %s30 = sphi 0, %s44
      %s31 = sphi 0, %s40
      %s32 = sphi 0, %s29
      %s33 = sphi 0, %s30
      %s34 = sphi 0, %s31
      %s35 = sphi 0, %s32
      %s36 = sphi 0, %s33
      %s37 = sphi 0, %s34
      %s53 = sphi 0, %s55
      %s56 = sphi 0, %s53
      %s57 = sphi 0, %s56
      %s73 = sphi 0, %s57
      %s81 = sphi 0, %s83
      %s84 = sphi 0, %s81
      %s85 = sphi 0, %s84
      %s101 = sphi 0, %s85
      %s109 = sphi 0, %s111
      %s112 = sphi 0, %s109
      %s113 = sphi 0, %s112
      %s129 = sphi 0, %s113
      %s137 = sphi 0, %s139
      %s140 = sphi 0, %s137
      %s141 = sphi 0, %s140
      %s157 = sphi 0, %s141
      %s163 = sphi 0, %s165
      %s166 = sphi 0, %s163
      %s167 = sphi 0, %s166
      %s183 = sphi 0, %s167
      %s189 = sphi 0, %s191
      %s192 = sphi 0, %s189
      %s193 = sphi 0, %s192
      %s209 = sphi 0, %s193
      %s217 = sphi 0, %s219
      %s220 = sphi 0, %s217
      %s221 = sphi 0, %s220
      %s237 = sphi 0, %s221
    $region4: #{tpu_custom_call.1} parent=1 // loop_header_branch
      %25 = sbr.rel (%p23) target = $region8
    $region5: #{tpu_custom_call.1} parent=1 // loop_body
      %s27 = ssub.s32 %s22, 1
      %s28 = ssub.s32 %s22, 2
      %s38 = sadd.s32 1, %s31
      %p39 = scmp.ge.s32.totalorder %s38, 1
      %s40 = scalar_select %p39, 0, %s38
      %s41 = sadd.s32 1, %s30
      %s42 = scalar_select %p39, %s41, %s30
      %p43 = scmp.ge.s32.totalorder %s42, 2
      %s44 = scalar_select %p43, 0, %s42
      %s45 = sadd.s32 1, %s29
      %s46 = scalar_select %p43, %s45, %s29
      %p47 = scmp.ge.s32.totalorder %s46, 1
      %s48 = scalar_select %p47, 0, %s46
      %s49 = ssub.s32 %s29, %s48
      %s50 = ssub.s32 %s31, %s40
      %s51 = sor.u32 %s49, %s50
      %p52 = scmp.eq.s32.totalorder %s51, 0
      %s54 = sadd.s32 %s53, 1
      %s55 = scalar_select %p52, %s53, %s54
      %p58 = pneg %p52
      %p59 = scmp.eq.s32.totalorder %s22, 1
      %p60 = por %p58, %p59
      %p61 = scmp.ne.s32.totalorder %s53, %s56
      %p62 = scmp.eq.s32.totalorder %s22, 0
      %p63 = por %p61, %p62
      %p64 = scmp.ne.s32.totalorder %s53, %s56
      %p65 = scmp.eq.s32.totalorder %s27, 1
      %p66 = por %p64, %p65
      %p67 = scmp.ne.s32.totalorder %s56, %s57
      %p68 = scmp.eq.s32.totalorder %s27, 0
      %p69 = por %p67, %p68
      %p70 = scmp.ne.s32.totalorder %s56, %s57
      %p71 = scmp.eq.s32.totalorder %s28, 1
      %p72 = por %p70, %p71
      %p74 = scmp.ne.s32.totalorder %s57, %s73
      %p75 = scmp.eq.s32.totalorder %s28, 0
      %p76 = por %p74, %p75
      %s77 = ssub.s32 %s31, %s40
      %s78 = ssub.s32 %s30, %s44
      %s79 = sor.u32 %s77, %s78
      %p80 = scmp.eq.s32.totalorder %s79, 0
      %s82 = sadd.s32 %s81, 1
      %s83 = scalar_select %p80, %s81, %s82
      %p86 = pneg %p80
      %p87 = scmp.eq.s32.totalorder %s22, 1
      %p88 = por %p86, %p87
      %p89 = scmp.ne.s32.totalorder %s81, %s84
      %p90 = scmp.eq.s32.totalorder %s22, 0
      %p91 = por %p89, %p90
      %p92 = scmp.ne.s32.totalorder %s81, %s84
      %p93 = scmp.eq.s32.totalorder %s27, 1
      %p94 = por %p92, %p93
      %p95 = scmp.ne.s32.totalorder %s84, %s85
      %p96 = scmp.eq.s32.totalorder %s27, 0
      %p97 = por %p95, %p96
      %p98 = scmp.ne.s32.totalorder %s84, %s85
      %p99 = scmp.eq.s32.totalorder %s28, 1
      %p100 = por %p98, %p99
      %p102 = scmp.ne.s32.totalorder %s85, %s101
      %p103 = scmp.eq.s32.totalorder %s28, 0
      %p104 = por %p102, %p103
      %s105 = ssub.s32 %s31, %s40
      %s106 = ssub.s32 %s30, %s44
      %s107 = sor.u32 %s105, %s106
      %p108 = scmp.eq.s32.totalorder %s107, 0
      %s110 = sadd.s32 %s109, 1
      %s111 = scalar_select %p108, %s109, %s110
      %p114 = pneg %p108
      %p115 = scmp.eq.s32.totalorder %s22, 1
      %p116 = por %p114, %p115
      %p117 = scmp.ne.s32.totalorder %s109, %s112
      %p118 = scmp.eq.s32.totalorder %s22, 0
      %p119 = por %p117, %p118
      %p120 = scmp.ne.s32.totalorder %s109, %s112
      %p121 = scmp.eq.s32.totalorder %s27, 1
      %p122 = por %p120, %p121
      %p123 = scmp.ne.s32.totalorder %s112, %s113
      %p124 = scmp.eq.s32.totalorder %s27, 0
      %p125 = por %p123, %p124
      %p126 = scmp.ne.s32.totalorder %s112, %s113
      %p127 = scmp.eq.s32.totalorder %s28, 1
      %p128 = por %p126, %p127
      %p130 = scmp.ne.s32.totalorder %s113, %s129
      %p131 = scmp.eq.s32.totalorder %s28, 0
      %p132 = por %p130, %p131
      %s133 = ssub.s32 %s31, %s40
      %s134 = ssub.s32 %s30, %s44
      %s135 = sor.u32 %s133, %s134
      %p136 = scmp.eq.s32.totalorder %s135, 0
      %s138 = sadd.s32 %s137, 1
      %s139 = scalar_select %p136, %s137, %s138
      %p142 = pneg %p136
      %p143 = scmp.eq.s32.totalorder %s22, 1
      %p144 = por %p142, %p143
      %p145 = scmp.ne.s32.totalorder %s137, %s140
      %p146 = scmp.eq.s32.totalorder %s22, 0
      %p147 = por %p145, %p146
      %p148 = scmp.ne.s32.totalorder %s137, %s140
      %p149 = scmp.eq.s32.totalorder %s27, 1
      %p150 = por %p148, %p149
      %p151 = scmp.ne.s32.totalorder %s140, %s141
      %p152 = scmp.eq.s32.totalorder %s27, 0
      %p153 = por %p151, %p152
      %p154 = scmp.ne.s32.totalorder %s140, %s141
      %p155 = scmp.eq.s32.totalorder %s28, 1
      %p156 = por %p154, %p155
      %p158 = scmp.ne.s32.totalorder %s141, %s157
      %p159 = scmp.eq.s32.totalorder %s28, 0
      %p160 = por %p158, %p159
      %s161 = ssub.s32 %s29, %s48
      %p162 = scmp.eq.s32.totalorder %s161, 0
      %s164 = sadd.s32 %s163, 1
      %s165 = scalar_select %p162, %s163, %s164
      %p168 = pneg %p162
      %p169 = scmp.eq.s32.totalorder %s22, 1
      %p170 = por %p168, %p169
      %p171 = scmp.ne.s32.totalorder %s163, %s166
      %p172 = scmp.eq.s32.totalorder %s22, 0
      %p173 = por %p171, %p172
      %p174 = scmp.ne.s32.totalorder %s163, %s166
      %p175 = scmp.eq.s32.totalorder %s27, 1
      %p176 = por %p174, %p175
      %p177 = scmp.ne.s32.totalorder %s166, %s167
      %p178 = scmp.eq.s32.totalorder %s27, 0
      %p179 = por %p177, %p178
      %p180 = scmp.ne.s32.totalorder %s166, %s167
      %p181 = scmp.eq.s32.totalorder %s28, 1
      %p182 = por %p180, %p181
      %p184 = scmp.ne.s32.totalorder %s167, %s183
      %p185 = scmp.eq.s32.totalorder %s28, 0
      %p186 = por %p184, %p185
      %s187 = ssub.s32 %s30, %s44
      %p188 = scmp.eq.s32.totalorder %s187, 0
      %s190 = sadd.s32 %s189, 1
      %s191 = scalar_select %p188, %s189, %s190
      %p194 = pneg %p188
      %p195 = scmp.eq.s32.totalorder %s22, 1
      %p196 = por %p194, %p195
      %p197 = scmp.ne.s32.totalorder %s189, %s192
      %p198 = scmp.eq.s32.totalorder %s22, 0
      %p199 = por %p197, %p198
      %p200 = scmp.ne.s32.totalorder %s189, %s192
      %p201 = scmp.eq.s32.totalorder %s27, 1
      %p202 = por %p200, %p201
      %p203 = scmp.ne.s32.totalorder %s192, %s193
      %p204 = scmp.eq.s32.totalorder %s27, 0
      %p205 = por %p203, %p204
      %p206 = scmp.ne.s32.totalorder %s192, %s193
      %p207 = scmp.eq.s32.totalorder %s28, 1
      %p208 = por %p206, %p207
      %p210 = scmp.ne.s32.totalorder %s193, %s209
      %p211 = scmp.eq.s32.totalorder %s28, 0
      %p212 = por %p210, %p211
      %s213 = ssub.s32 %s29, %s48
      %s214 = ssub.s32 %s30, %s44
      %s215 = sor.u32 %s213, %s214
      %p216 = scmp.eq.s32.totalorder %s215, 0
      %s218 = sadd.s32 %s217, 1
      %s219 = scalar_select %p216, %s217, %s218
      %p222 = pneg %p216
      %p223 = scmp.eq.s32.totalorder %s22, 1
      %p224 = por %p222, %p223
      %p225 = scmp.ne.s32.totalorder %s217, %s220
      %p226 = scmp.eq.s32.totalorder %s22, 0
      %p227 = por %p225, %p226
      %p228 = scmp.ne.s32.totalorder %s217, %s220
      %p229 = scmp.eq.s32.totalorder %s27, 1
      %p230 = por %p228, %p229
      %p231 = scmp.ne.s32.totalorder %s220, %s221
      %p232 = scmp.eq.s32.totalorder %s27, 0
      %p233 = por %p231, %p232
      %p234 = scmp.ne.s32.totalorder %s220, %s221
      %p235 = scmp.eq.s32.totalorder %s28, 1
      %p236 = por %p234, %p235
      %p238 = scmp.ne.s32.totalorder %s221, %s237
      %p239 = scmp.eq.s32.totalorder %s28, 0
      %p240 = por %p238, %p239
      %p241 = scmp.le.s32.totalorder 1, %s22
      %p242 = scmp.lt.s32.totalorder %s22, 3
      %p243 = pnand %p241, %p242
      %p244 = pneg %p243
      // Predicated region
      $region9: #{tpu_custom_call.1} parent=5 // pred_check
        _
      $region10: #{tpu_custom_call.1} parent=5 // pred_check_branch
        %246 = sbr.rel (%p243) target = $region12
      $region11: #{tpu_custom_call.1} parent=5 // pred_region
        %s247 = ssub.s32 %s22, 1
        // Predicated region
        $region13: #{tpu_custom_call.1} parent=11 // pred_check
          %p248 = pneg %p69
        $region14: #{tpu_custom_call.1} parent=11 // pred_check_branch
          %250 = sbr.rel (%p248) target = $region16
        $region15: #{tpu_custom_call.1} parent=11 // pred_region
          %s251 = smul.u32 2, %s32
          %s252 = smul.u32 8, %s34
          %254 = vsyncadd [#allocation5], 0
          %s255 = smul.addr %s251, 8
          %s256 = sadd.s32 %s252, %s255
          %s257 = smul.addr %s256, 4
          %s258 = scalar_lea.hbm %s0, %s257
          %s259 = sshll.u32 %s258, 4
          %s260 = int_to_ptr.hbm [resolvable:$true] %s259
          %s261 = sshll.u32 [#allocation4], 4
          %s262 = int_to_ptr.vmem [resolvable:$true] %s261
          %267 = dma.hbm_to_vmem [thread:$0]  %s260, 1024, %s262, [#allocation5], 512, 512, 32
        $region16: #{tpu_custom_call.1} parent=11 // pred_fallthru
          _
        // Predicated region
        $region17: #{tpu_custom_call.1} parent=11 // pred_check
          %p268 = pneg %p179
        $region18: #{tpu_custom_call.1} parent=11 // pred_check_branch
          %270 = sbr.rel (%p268) target = $region20
        $region19: #{tpu_custom_call.1} parent=11 // pred_region
          %s271 = smul.u32 2, %s32
          %p272 = scmp.lt.s32.totalorder %s271, 1
          %s273 = scalar_select %p272, %s271, 1
          %s274 = smul.addr %s273, 8
          %s275 = scalar_lea.vmem %s4, %s274
          %s276 = smul.u32 2, %s32
        $region20: #{tpu_custom_call.1} parent=11 // pred_fallthru
          _
      $region12: #{tpu_custom_call.1} parent=5 // pred_fallthru
        _
      %p277 = scmp.lt.s32.totalorder %s22, 2
      // Predicated region
      $region21: #{tpu_custom_call.1} parent=5 // pred_check
        %p278 = pneg %p277
      $region22: #{tpu_custom_call.1} parent=5 // pred_check_branch
        %280 = sbr.rel (%p278) target = $region24
      $region23: #{tpu_custom_call.1} parent=5 // pred_region
        // Predicated region
        $region25: #{tpu_custom_call.1} parent=23 // pred_check
          %p281 = pneg %p91
        $region26: #{tpu_custom_call.1} parent=23 // pred_check_branch
          %283 = sbr.rel (%p281) target = $region28
        $region27: #{tpu_custom_call.1} parent=23 // pred_region
          %s284 = sand.u32 %s22, 1
          %s285 = scalar_lea.sflag [#allocation8], %s284
          %s286 = sand.u32 %s81, 1
          %s287 = smul.addr %s286, 1024
          %s288 = scalar_lea.vmem [#allocation7], %s287
          %s289 = smul.u32 128, %s31
          %s290 = smul.u32 2, %s30
          %292 = vsyncadd %s285, 0
          %s293 = smul.addr %s289, 4
          %s294 = sadd.s32 %s290, %s293
          %s295 = smul.addr %s294, 4
          %s296 = scalar_lea.hbm %s1, %s295
          %s297 = sshll.u32 %s296, 4
          %s298 = int_to_ptr.hbm [resolvable:$true] %s297
          %s299 = sshll.u32 %s288, 4
          %s300 = int_to_ptr.vmem [resolvable:$true] %s299
          %305 = dma.hbm_to_vmem [thread:$0]  %s298, 16384, %s300, %s285, 256, 128, 8
        $region28: #{tpu_custom_call.1} parent=23 // pred_fallthru
          _
        // Predicated region
        $region29: #{tpu_custom_call.1} parent=23 // pred_check
          %p306 = pneg %p119
        $region30: #{tpu_custom_call.1} parent=23 // pred_check_branch
          %308 = sbr.rel (%p306) target = $region32
        $region31: #{tpu_custom_call.1} parent=23 // pred_region
          %s309 = sand.u32 %s22, 1
          %s310 = scalar_lea.sflag [#allocation8], %s309
          %s311 = sand.u32 %s109, 1
          %s312 = smul.addr %s311, 16
          %s313 = scalar_lea.vmem [#allocation9], %s312
          %s314 = smul.u32 2, %s30
          %316 = vsyncadd %s310, 0
          %s317 = smul.addr %s31, 4
          %s318 = sadd.s32 %s314, %s317
          %s319 = smul.addr %s318, 8
          %s320 = scalar_lea.hbm %s2, %s319
          %s322 = sshll.u32 %s320, 4
          %s323 = int_to_ptr.hbm [resolvable:$true] %s322
          %s324 = sshll.u32 %s313, 4
          %s325 = int_to_ptr.vmem [resolvable:$true] %s324
          %327 = dma.hbm_to_vmem [thread:$0]  %s323, 256, %s325, %s310
        $region32: #{tpu_custom_call.1} parent=23 // pred_fallthru
          _
        // Predicated region
        $region33: #{tpu_custom_call.1} parent=23 // pred_check
          %p328 = pneg %p147
        $region34: #{tpu_custom_call.1} parent=23 // pred_check_branch
          %330 = sbr.rel (%p328) target = $region36
        $region35: #{tpu_custom_call.1} parent=23 // pred_region
          %s331 = sand.u32 %s137, 1
          %s332 = scalar_lea.sflag [#allocation11], %s331
          %s333 = sand.u32 %s137, 1
          %s334 = smul.addr %s333, 16
          %s335 = scalar_lea.vmem [#allocation10], %s334
          %s336 = smul.u32 2, %s30
          %338 = vsyncadd %s332, 0
          %s339 = smul.addr %s31, 4
          %s340 = sadd.s32 %s336, %s339
          %s341 = smul.addr %s340, 8
          %s342 = scalar_lea.hbm %s3, %s341
          %s344 = sshll.u32 %s342, 4
          %s345 = int_to_ptr.hbm [resolvable:$true] %s344
          %s346 = sshll.u32 %s335, 4
          %s347 = int_to_ptr.vmem [resolvable:$true] %s346
          %349 = dma.hbm_to_vmem [thread:$0]  %s345, 256, %s347, %s332
        $region36: #{tpu_custom_call.1} parent=23 // pred_fallthru
          _
        // Predicated region
        $region37: #{tpu_custom_call.1} parent=23 // pred_check
          %p350 = pneg %p199
        $region38: #{tpu_custom_call.1} parent=23 // pred_check_branch
          %352 = sbr.rel (%p350) target = $region40
        $region39: #{tpu_custom_call.1} parent=23 // pred_region
          %s353 = smul.u32 2, %s30
          %p354 = scmp.lt.s32.totalorder %s353, 3
          %s355 = scalar_select %p354, %s353, 3
          %s356 = scalar_lea.vmem %s5, %s355
          %s357 = smul.u32 2, %s30
        $region40: #{tpu_custom_call.1} parent=23 // pred_fallthru
          _
      $region24: #{tpu_custom_call.1} parent=5 // pred_fallthru
        _
      %p358 = scmp.le.s32.totalorder 1, %s22
      %p359 = scmp.lt.s32.totalorder %s22, 3
      %p360 = pnand %p358, %p359
      %p361 = pneg %p360
      // Predicated region
      $region41: #{tpu_custom_call.1} parent=5 // pred_check
        _
      $region42: #{tpu_custom_call.1} parent=5 // pred_check_branch
        %363 = sbr.rel (%p360) target = $region44
      $region43: #{tpu_custom_call.1} parent=5 // pred_region
        %s364 = ssub.s32 %s22, 1
        // Predicated region
        $region45: #{tpu_custom_call.1} parent=43 // pred_check
          %p365 = pneg %p69
        $region46: #{tpu_custom_call.1} parent=43 // pred_check_branch
          %367 = sbr.rel (%p365) target = $region48
        $region47: #{tpu_custom_call.1} parent=43 // pred_region
          %369 = dma.done [#allocation5], 1024
        $region48: #{tpu_custom_call.1} parent=43 // pred_fallthru
          _
        %s370 = sand.u32 %s27, 1
        %s371 = scalar_lea.sflag [#allocation8], %s370
        %s372 = sand.u32 %s84, 1
        %s373 = smul.addr %s372, 1024
        %s374 = scalar_lea.vmem [#allocation7], %s373
        // Predicated region
        $region49: #{tpu_custom_call.1} parent=43 // pred_check
          %p375 = pneg %p97
        $region50: #{tpu_custom_call.1} parent=43 // pred_check_branch
          %377 = sbr.rel (%p375) target = $region52
        $region51: #{tpu_custom_call.1} parent=43 // pred_region
          %379 = dma.done %s371, 16384
        $region52: #{tpu_custom_call.1} parent=43 // pred_fallthru
          _
        %s380 = sand.u32 %s27, 1
        %s381 = scalar_lea.sflag [#allocation8], %s380
        %s382 = sand.u32 %s112, 1
        %s383 = smul.addr %s382, 16
        %s384 = scalar_lea.vmem [#allocation9], %s383
        // Predicated region
        $region53: #{tpu_custom_call.1} parent=43 // pred_check
          %p385 = pneg %p125
        $region54: #{tpu_custom_call.1} parent=43 // pred_check_branch
          %387 = sbr.rel (%p385) target = $region56
        $region55: #{tpu_custom_call.1} parent=43 // pred_region
          %389 = dma.done %s381, 256
        $region56: #{tpu_custom_call.1} parent=43 // pred_fallthru
          _
        %s390 = sand.u32 %s140, 1
        %s391 = scalar_lea.sflag [#allocation11], %s390
        %s392 = sand.u32 %s140, 1
        %s393 = smul.addr %s392, 16
        %s394 = scalar_lea.vmem [#allocation10], %s393
        // Predicated region
        $region57: #{tpu_custom_call.1} parent=43 // pred_check
          %p395 = pneg %p153
        $region58: #{tpu_custom_call.1} parent=43 // pred_check_branch
          %397 = sbr.rel (%p395) target = $region60
        $region59: #{tpu_custom_call.1} parent=43 // pred_region
          %399 = dma.done %s391, 256
        $region60: #{tpu_custom_call.1} parent=43 // pred_fallthru
          _
        %p400 = pneg %p69
        %p401 = pneg %p66
        %s402 = sand.u32 %s27, 1
        %s403 = scalar_lea.sflag [#allocation8], %s402
        %s404 = sand.u32 %s84, 1
        %s405 = smul.addr %s404, 1024
        %s406 = scalar_lea.vmem [#allocation7], %s405
        %p407 = pneg %p97
        %p408 = pneg %p94
        %s409 = sand.u32 %s27, 1
        %s410 = scalar_lea.sflag [#allocation8], %s409
        %s411 = sand.u32 %s112, 1
        %s412 = smul.addr %s411, 16
        %s413 = scalar_lea.vmem [#allocation9], %s412
        %p414 = pneg %p125
        %p415 = pneg %p122
        %s416 = sand.u32 %s140, 1
        %s417 = scalar_lea.sflag [#allocation11], %s416
        %s418 = sand.u32 %s140, 1
        %s419 = smul.addr %s418, 16
        %s420 = scalar_lea.vmem [#allocation10], %s419
        %p421 = pneg %p153
        %p422 = pneg %p150
        %s423 = smul.u32 2, %s32
        %p424 = scmp.lt.s32.totalorder %s423, 1
        %s425 = scalar_select %p424, %s423, 1
        %s426 = smul.addr %s425, 8
        %s427 = scalar_lea.vmem %s4, %s426
        %p428 = pneg %p179
        %p429 = pneg %p176
        %s430 = smul.u32 2, %s33
        %p431 = scmp.lt.s32.totalorder %s430, 3
        %s432 = scalar_select %p431, %s430, 3
        %s433 = scalar_lea.vmem %s5, %s432
        %p434 = pneg %p205
        %p435 = pneg %p202
        %p436 = pneg %p233
        %p437 = pneg %p230
        %s438 = sand.u32 %s220, 1
        %s439 = scalar_lea.sflag [#allocation6], %s438
        %s440 = sand.u32 %s220, 1
        %s441 = smul.addr %s440, 16
        %s442 = scalar_lea.vmem [#allocation12], %s441
        %s443 = smul.u32 2, %s32
        %s444 = smul.u32 8, %s34
        %s445 = smul.u32 128, %s34
        %s446 = smul.u32 2, %s33
        %s447 = smul.u32 2, %s33
        %s448 = smul.u32 2, %s33
        %s449 = smul.u32 2, %s32
        %p450 = scmp.lt.s32.totalorder %s449, 1
        %s451 = scalar_select %p450, %s449, 1
        %s452 = smul.addr %s451, 8
        %s453 = scalar_lea.vmem %s4, %s452
        %s454 = smul.u32 2, %s32
        %s455 = smul.u32 2, %s33
        %p456 = scmp.lt.s32.totalorder %s455, 3
        %s457 = scalar_select %p456, %s455, 3
        %s458 = scalar_lea.vmem %s5, %s457
        %s459 = smul.u32 2, %s33
        %s460 = smul.u32 2, %s32
        %s461 = smul.u32 2, %s33
        %p462 = scmp.eq.s32.totalorder %s34, 0
        // Predicated region
        $region61: #{tpu_custom_call.1} parent=43 // pred_check
          %p463 = pneg %p462
        $region62: #{tpu_custom_call.1} parent=43 // pred_check_branch
          %465 = sbr.rel (%p463) target = $region64
        $region63: #{tpu_custom_call.1} parent=43 // pred_region
          %466 = vst [vmem:[#allocation3] sm:$0xff] 0.0
          %467 = vst [vmem:[#allocation3 + $0x8] sm:$0xff] 0.0
          %468 = vst [vmem:[#allocation3 + $0x10] sm:$0xff] 0.0
          %469 = vst [vmem:[#allocation3 + $0x18] sm:$0xff] 0.0
        $region64: #{tpu_custom_call.1} parent=43 // pred_fallthru
          _
        %v470 = vld [vmem:[%s374] sm:$0xff]
        %v471 = vld [vmem:[%s374 + $0x8] sm:$0xff]
        %v472 = vld [vmem:[%s374 + $0x10] sm:$0xff]
        %v473 = vld [vmem:[%s374 + $0x18] sm:$0xff]
        %v474 = vld [vmem:[%s374 + $0x20] sm:$0xff]
        %v475 = vld [vmem:[%s374 + $0x28] sm:$0xff]
        %v476 = vld [vmem:[%s374 + $0x30] sm:$0xff]
        %v477 = vld [vmem:[%s374 + $0x38] sm:$0xff]
        %v478 = vld [vmem:[%s374 + $0x40] sm:$0xff]
        %v479 = vld [vmem:[%s374 + $0x48] sm:$0xff]
        %v480 = vld [vmem:[%s374 + $0x50] sm:$0xff]
        %v481 = vld [vmem:[%s374 + $0x58] sm:$0xff]
        %v482 = vld [vmem:[%s374 + $0x60] sm:$0xff]
        %v483 = vld [vmem:[%s374 + $0x68] sm:$0xff]
        %v484 = vld [vmem:[%s374 + $0x70] sm:$0xff]
        %v485 = vld [vmem:[%s374 + $0x78] sm:$0xff]
        %v486 = vunpack.c.l.bf16 %v470
        %v487 = vunpack.c.h.bf16 %v470
        %v488 = vunpack.c.l.bf16 %v471
        %v489 = vunpack.c.h.bf16 %v471
        %v490 = vunpack.c.l.bf16 %v472
        %v491 = vunpack.c.h.bf16 %v472
        %v492 = vunpack.c.l.bf16 %v473
        %v493 = vunpack.c.h.bf16 %v473
        %v494 = vunpack.c.l.bf16 %v474
        %v495 = vunpack.c.h.bf16 %v474
        %v496 = vunpack.c.l.bf16 %v475
        %v497 = vunpack.c.h.bf16 %v475
        %v498 = vunpack.c.l.bf16 %v476
        %v499 = vunpack.c.h.bf16 %v476
        %v500 = vunpack.c.l.bf16 %v477
        %v501 = vunpack.c.h.bf16 %v477
        %v502 = vunpack.c.l.bf16 %v478
        %v503 = vunpack.c.h.bf16 %v478
        %v504 = vunpack.c.l.bf16 %v479
        %v505 = vunpack.c.h.bf16 %v479
        %v506 = vunpack.c.l.bf16 %v480
        %v507 = vunpack.c.h.bf16 %v480
        %v508 = vunpack.c.l.bf16 %v481
        %v509 = vunpack.c.h.bf16 %v481
        %v510 = vunpack.c.l.bf16 %v482
        %v511 = vunpack.c.h.bf16 %v482
        %v512 = vunpack.c.l.bf16 %v483
        %v513 = vunpack.c.h.bf16 %v483
        %v514 = vunpack.c.l.bf16 %v484
        %v515 = vunpack.c.h.bf16 %v484
        %v516 = vunpack.c.l.bf16 %v485
        %v517 = vunpack.c.h.bf16 %v485
        %v518 = vld [vmem:[%s384] ss:$8 sm:$0x3]
        %v520 = vperm.slane %v518, 0
        %v521 = vperm.slane %v518, 1
        %v524 = vmul.f32 %v486, %v520
        %v525 = vmul.f32 %v487, %v521
        %v526 = vmul.f32 %v488, %v520
        %v527 = vmul.f32 %v489, %v521
        %v528 = vmul.f32 %v490, %v520
        %v529 = vmul.f32 %v491, %v521
        %v530 = vmul.f32 %v492, %v520
        %v531 = vmul.f32 %v493, %v521
        %v532 = vmul.f32 %v494, %v520
        %v533 = vmul.f32 %v495, %v521
        %v534 = vmul.f32 %v496, %v520
        %v535 = vmul.f32 %v497, %v521
        %v536 = vmul.f32 %v498, %v520
        %v537 = vmul.f32 %v499, %v521
        %v538 = vmul.f32 %v500, %v520
        %v539 = vmul.f32 %v501, %v521
        %v540 = vmul.f32 %v502, %v520
        %v541 = vmul.f32 %v503, %v521
        %v542 = vmul.f32 %v504, %v520
        %v543 = vmul.f32 %v505, %v521
        %v544 = vmul.f32 %v506, %v520
        %v545 = vmul.f32 %v507, %v521
        %v546 = vmul.f32 %v508, %v520
        %v547 = vmul.f32 %v509, %v521
        %v548 = vmul.f32 %v510, %v520
        %v549 = vmul.f32 %v511, %v521
        %v550 = vmul.f32 %v512, %v520
        %v551 = vmul.f32 %v513, %v521
        %v552 = vmul.f32 %v514, %v520
        %v553 = vmul.f32 %v515, %v521
        %v554 = vmul.f32 %v516, %v520
        %v555 = vmul.f32 %v517, %v521
        %v556 = vld [vmem:[%s394] ss:$8 sm:$0x3]
        %v558 = vperm.slane %v556, 0
        %v559 = vperm.slane %v556, 1
        %v562 = vsub.f32 %v524, %v558
        %v563 = vsub.f32 %v525, %v559
        %v564 = vsub.f32 %v526, %v558
        %v565 = vsub.f32 %v527, %v559
        %v566 = vsub.f32 %v528, %v558
        %v567 = vsub.f32 %v529, %v559
        %v568 = vsub.f32 %v530, %v558
        %v569 = vsub.f32 %v531, %v559
        %v570 = vsub.f32 %v532, %v558
        %v571 = vsub.f32 %v533, %v559
        %v572 = vsub.f32 %v534, %v558
        %v573 = vsub.f32 %v535, %v559
        %v574 = vsub.f32 %v536, %v558
        %v575 = vsub.f32 %v537, %v559
        %v576 = vsub.f32 %v538, %v558
        %v577 = vsub.f32 %v539, %v559
        %v578 = vsub.f32 %v540, %v558
        %v579 = vsub.f32 %v541, %v559
        %v580 = vsub.f32 %v542, %v558
        %v581 = vsub.f32 %v543, %v559
        %v582 = vsub.f32 %v544, %v558
        %v583 = vsub.f32 %v545, %v559
        %v584 = vsub.f32 %v546, %v558
        %v585 = vsub.f32 %v547, %v559
        %v586 = vsub.f32 %v548, %v558
        %v587 = vsub.f32 %v549, %v559
        %v588 = vsub.f32 %v550, %v558
        %v589 = vsub.f32 %v551, %v559
        %v590 = vsub.f32 %v552, %v558
        %v591 = vsub.f32 %v553, %v559
        %v592 = vsub.f32 %v554, %v558
        %v593 = vsub.f32 %v555, %v559
        %v594 = vpack.c.bf16 %v563, %v562
        %v595 = vpack.c.bf16 %v565, %v564
        %v596 = vpack.c.bf16 %v567, %v566
        %v597 = vpack.c.bf16 %v569, %v568
        %v598 = vpack.c.bf16 %v571, %v570
        %v599 = vpack.c.bf16 %v573, %v572
        %v600 = vpack.c.bf16 %v575, %v574
        %v601 = vpack.c.bf16 %v577, %v576
        %v602 = vpack.c.bf16 %v579, %v578
        %v603 = vpack.c.bf16 %v581, %v580
        %v604 = vpack.c.bf16 %v583, %v582
        %v605 = vpack.c.bf16 %v585, %v584
        %v606 = vpack.c.bf16 %v587, %v586
        %v607 = vpack.c.bf16 %v589, %v588
        %v608 = vpack.c.bf16 %v591, %v590
        %v609 = vpack.c.bf16 %v593, %v592
        %610 = vst [vmem:[#allocation2] sm:$0xff] %v594
        %611 = vst [vmem:[#allocation2 + $0x8] sm:$0xff] %v595
        %612 = vst [vmem:[#allocation2 + $0x10] sm:$0xff] %v596
        %613 = vst [vmem:[#allocation2 + $0x18] sm:$0xff] %v597
        %614 = vst [vmem:[#allocation2 + $0x20] sm:$0xff] %v598
        %615 = vst [vmem:[#allocation2 + $0x28] sm:$0xff] %v599
        %616 = vst [vmem:[#allocation2 + $0x30] sm:$0xff] %v600
        %617 = vst [vmem:[#allocation2 + $0x38] sm:$0xff] %v601
        %618 = vst [vmem:[#allocation2 + $0x40] sm:$0xff] %v602
        %619 = vst [vmem:[#allocation2 + $0x48] sm:$0xff] %v603
        %620 = vst [vmem:[#allocation2 + $0x50] sm:$0xff] %v604
        %621 = vst [vmem:[#allocation2 + $0x58] sm:$0xff] %v605
        %622 = vst [vmem:[#allocation2 + $0x60] sm:$0xff] %v606
        %623 = vst [vmem:[#allocation2 + $0x68] sm:$0xff] %v607
        %624 = vst [vmem:[#allocation2 + $0x70] sm:$0xff] %v608
        %625 = vst [vmem:[#allocation2 + $0x78] sm:$0xff] %v609
        %v626 = vld [vmem:[%s374 + $0x80] sm:$0xff]
        %v627 = vld [vmem:[%s374 + $0x88] sm:$0xff]
        %v628 = vld [vmem:[%s374 + $0x90] sm:$0xff]
        %v629 = vld [vmem:[%s374 + $0x98] sm:$0xff]
        %v630 = vld [vmem:[%s374 + $0xa0] sm:$0xff]
        %v631 = vld [vmem:[%s374 + $0xa8] sm:$0xff]
        %v632 = vld [vmem:[%s374 + $0xb0] sm:$0xff]
        %v633 = vld [vmem:[%s374 + $0xb8] sm:$0xff]
        %v634 = vld [vmem:[%s374 + $0xc0] sm:$0xff]
        %v635 = vld [vmem:[%s374 + $0xc8] sm:$0xff]
        %v636 = vld [vmem:[%s374 + $0xd0] sm:$0xff]
        %v637 = vld [vmem:[%s374 + $0xd8] sm:$0xff]
        %v638 = vld [vmem:[%s374 + $0xe0] sm:$0xff]
        %v639 = vld [vmem:[%s374 + $0xe8] sm:$0xff]
        %v640 = vld [vmem:[%s374 + $0xf0] sm:$0xff]
        %v641 = vld [vmem:[%s374 + $0xf8] sm:$0xff]
        %v642 = vunpack.c.l.bf16 %v626
        %v643 = vunpack.c.h.bf16 %v626
        %v644 = vunpack.c.l.bf16 %v627
        %v645 = vunpack.c.h.bf16 %v627
        %v646 = vunpack.c.l.bf16 %v628
        %v647 = vunpack.c.h.bf16 %v628
        %v648 = vunpack.c.l.bf16 %v629
        %v649 = vunpack.c.h.bf16 %v629
        %v650 = vunpack.c.l.bf16 %v630
        %v651 = vunpack.c.h.bf16 %v630
        %v652 = vunpack.c.l.bf16 %v631
        %v653 = vunpack.c.h.bf16 %v631
        %v654 = vunpack.c.l.bf16 %v632
        %v655 = vunpack.c.h.bf16 %v632
        %v656 = vunpack.c.l.bf16 %v633
        %v657 = vunpack.c.h.bf16 %v633
        %v658 = vunpack.c.l.bf16 %v634
        %v659 = vunpack.c.h.bf16 %v634
        %v660 = vunpack.c.l.bf16 %v635
        %v661 = vunpack.c.h.bf16 %v635
        %v662 = vunpack.c.l.bf16 %v636
        %v663 = vunpack.c.h.bf16 %v636
        %v664 = vunpack.c.l.bf16 %v637
        %v665 = vunpack.c.h.bf16 %v637
        %v666 = vunpack.c.l.bf16 %v638
        %v667 = vunpack.c.h.bf16 %v638
        %v668 = vunpack.c.l.bf16 %v639
        %v669 = vunpack.c.h.bf16 %v639
        %v670 = vunpack.c.l.bf16 %v640
        %v671 = vunpack.c.h.bf16 %v640
        %v672 = vunpack.c.l.bf16 %v641
        %v673 = vunpack.c.h.bf16 %v641
        %s674 = scalar_lea.vmem %s384, 1 [#allocation9]
        %v675 = vld [vmem:[%s674] ss:$8 sm:$0x3]
        %v677 = vperm.slane %v675, 0
        %v678 = vperm.slane %v675, 1
        %v681 = vmul.f32 %v642, %v677
        %v682 = vmul.f32 %v643, %v678
        %v683 = vmul.f32 %v644, %v677
        %v684 = vmul.f32 %v645, %v678
        %v685 = vmul.f32 %v646, %v677
        %v686 = vmul.f32 %v647, %v678
        %v687 = vmul.f32 %v648, %v677
        %v688 = vmul.f32 %v649, %v678
        %v689 = vmul.f32 %v650, %v677
        %v690 = vmul.f32 %v651, %v678
        %v691 = vmul.f32 %v652, %v677
        %v692 = vmul.f32 %v653, %v678
        %v693 = vmul.f32 %v654, %v677
        %v694 = vmul.f32 %v655, %v678
        %v695 = vmul.f32 %v656, %v677
        %v696 = vmul.f32 %v657, %v678
        %v697 = vmul.f32 %v658, %v677
        %v698 = vmul.f32 %v659, %v678
        %v699 = vmul.f32 %v660, %v677
        %v700 = vmul.f32 %v661, %v678
        %v701 = vmul.f32 %v662, %v677
        %v702 = vmul.f32 %v663, %v678
        %v703 = vmul.f32 %v664, %v677
        %v704 = vmul.f32 %v665, %v678
        %v705 = vmul.f32 %v666, %v677
        %v706 = vmul.f32 %v667, %v678
        %v707 = vmul.f32 %v668, %v677
        %v708 = vmul.f32 %v669, %v678
        %v709 = vmul.f32 %v670, %v677
        %v710 = vmul.f32 %v671, %v678
        %v711 = vmul.f32 %v672, %v677
        %v712 = vmul.f32 %v673, %v678
        %s713 = scalar_lea.vmem %s394, 1 [#allocation10]
        %v714 = vld [vmem:[%s713] ss:$8 sm:$0x3]
        %v716 = vperm.slane %v714, 0
        %v717 = vperm.slane %v714, 1
        %v720 = vsub.f32 %v681, %v716
        %v721 = vsub.f32 %v682, %v717
        %v722 = vsub.f32 %v683, %v716
        %v723 = vsub.f32 %v684, %v717
        %v724 = vsub.f32 %v685, %v716
        %v725 = vsub.f32 %v686, %v717
        %v726 = vsub.f32 %v687, %v716
        %v727 = vsub.f32 %v688, %v717
        %v728 = vsub.f32 %v689, %v716
        %v729 = vsub.f32 %v690, %v717
        %v730 = vsub.f32 %v691, %v716
        %v731 = vsub.f32 %v692, %v717
        %v732 = vsub.f32 %v693, %v716
        %v733 = vsub.f32 %v694, %v717
        %v734 = vsub.f32 %v695, %v716
        %v735 = vsub.f32 %v696, %v717
        %v736 = vsub.f32 %v697, %v716
        %v737 = vsub.f32 %v698, %v717
        %v738 = vsub.f32 %v699, %v716
        %v739 = vsub.f32 %v700, %v717
        %v740 = vsub.f32 %v701, %v716
        %v741 = vsub.f32 %v702, %v717
        %v742 = vsub.f32 %v703, %v716
        %v743 = vsub.f32 %v704, %v717
        %v744 = vsub.f32 %v705, %v716
        %v745 = vsub.f32 %v706, %v717
        %v746 = vsub.f32 %v707, %v716
        %v747 = vsub.f32 %v708, %v717
        %v748 = vsub.f32 %v709, %v716
        %v749 = vsub.f32 %v710, %v717
        %v750 = vsub.f32 %v711, %v716
        %v751 = vsub.f32 %v712, %v717
        %v752 = vpack.c.bf16 %v721, %v720
        %v753 = vpack.c.bf16 %v723, %v722
        %v754 = vpack.c.bf16 %v725, %v724
        %v755 = vpack.c.bf16 %v727, %v726
        %v756 = vpack.c.bf16 %v729, %v728
        %v757 = vpack.c.bf16 %v731, %v730
        %v758 = vpack.c.bf16 %v733, %v732
        %v759 = vpack.c.bf16 %v735, %v734
        %v760 = vpack.c.bf16 %v737, %v736
        %v761 = vpack.c.bf16 %v739, %v738
        %v762 = vpack.c.bf16 %v741, %v740
        %v763 = vpack.c.bf16 %v743, %v742
        %v764 = vpack.c.bf16 %v745, %v744
        %v765 = vpack.c.bf16 %v747, %v746
        %v766 = vpack.c.bf16 %v749, %v748
        %v767 = vpack.c.bf16 %v751, %v750
        %768 = vst [vmem:[#allocation2 + $0x80] sm:$0xff] %v752
        %769 = vst [vmem:[#allocation2 + $0x88] sm:$0xff] %v753
        %770 = vst [vmem:[#allocation2 + $0x90] sm:$0xff] %v754
        %771 = vst [vmem:[#allocation2 + $0x98] sm:$0xff] %v755
        %772 = vst [vmem:[#allocation2 + $0xa0] sm:$0xff] %v756
        %773 = vst [vmem:[#allocation2 + $0xa8] sm:$0xff] %v757
        %774 = vst [vmem:[#allocation2 + $0xb0] sm:$0xff] %v758
        %775 = vst [vmem:[#allocation2 + $0xb8] sm:$0xff] %v759
        %776 = vst [vmem:[#allocation2 + $0xc0] sm:$0xff] %v760
        %777 = vst [vmem:[#allocation2 + $0xc8] sm:$0xff] %v761
        %778 = vst [vmem:[#allocation2 + $0xd0] sm:$0xff] %v762
        %779 = vst [vmem:[#allocation2 + $0xd8] sm:$0xff] %v763
        %780 = vst [vmem:[#allocation2 + $0xe0] sm:$0xff] %v764
        %781 = vst [vmem:[#allocation2 + $0xe8] sm:$0xff] %v765
        %782 = vst [vmem:[#allocation2 + $0xf0] sm:$0xff] %v766
        %783 = vst [vmem:[#allocation2 + $0xf8] sm:$0xff] %v767
        %v784 = vld [vmem:[%s374 + $0x100] sm:$0xff]
        %v785 = vld [vmem:[%s374 + $0x108] sm:$0xff]
        %v786 = vld [vmem:[%s374 + $0x110] sm:$0xff]
        %v787 = vld [vmem:[%s374 + $0x118] sm:$0xff]
        %v788 = vld [vmem:[%s374 + $0x120] sm:$0xff]
        %v789 = vld [vmem:[%s374 + $0x128] sm:$0xff]
        %v790 = vld [vmem:[%s374 + $0x130] sm:$0xff]
        %v791 = vld [vmem:[%s374 + $0x138] sm:$0xff]
        %v792 = vld [vmem:[%s374 + $0x140] sm:$0xff]
        %v793 = vld [vmem:[%s374 + $0x148] sm:$0xff]
        %v794 = vld [vmem:[%s374 + $0x150] sm:$0xff]
        %v795 = vld [vmem:[%s374 + $0x158] sm:$0xff]
        %v796 = vld [vmem:[%s374 + $0x160] sm:$0xff]
        %v797 = vld [vmem:[%s374 + $0x168] sm:$0xff]
        %v798 = vld [vmem:[%s374 + $0x170] sm:$0xff]
        %v799 = vld [vmem:[%s374 + $0x178] sm:$0xff]
        %v800 = vunpack.c.l.bf16 %v784
        %v801 = vunpack.c.h.bf16 %v784
        %v802 = vunpack.c.l.bf16 %v785
        %v803 = vunpack.c.h.bf16 %v785
        %v804 = vunpack.c.l.bf16 %v786
        %v805 = vunpack.c.h.bf16 %v786
        %v806 = vunpack.c.l.bf16 %v787
        %v807 = vunpack.c.h.bf16 %v787
        %v808 = vunpack.c.l.bf16 %v788
        %v809 = vunpack.c.h.bf16 %v788
        %v810 = vunpack.c.l.bf16 %v789
        %v811 = vunpack.c.h.bf16 %v789
        %v812 = vunpack.c.l.bf16 %v790
        %v813 = vunpack.c.h.bf16 %v790
        %v814 = vunpack.c.l.bf16 %v791
        %v815 = vunpack.c.h.bf16 %v791
        %v816 = vunpack.c.l.bf16 %v792
        %v817 = vunpack.c.h.bf16 %v792
        %v818 = vunpack.c.l.bf16 %v793
        %v819 = vunpack.c.h.bf16 %v793
        %v820 = vunpack.c.l.bf16 %v794
        %v821 = vunpack.c.h.bf16 %v794
        %v822 = vunpack.c.l.bf16 %v795
        %v823 = vunpack.c.h.bf16 %v795
        %v824 = vunpack.c.l.bf16 %v796
        %v825 = vunpack.c.h.bf16 %v796
        %v826 = vunpack.c.l.bf16 %v797
        %v827 = vunpack.c.h.bf16 %v797
        %v828 = vunpack.c.l.bf16 %v798
        %v829 = vunpack.c.h.bf16 %v798
        %v830 = vunpack.c.l.bf16 %v799
        %v831 = vunpack.c.h.bf16 %v799
        %s832 = scalar_lea.vmem %s384, 2 [#allocation9]
        %v833 = vld [vmem:[%s832] ss:$8 sm:$0x3]
        %v835 = vperm.slane %v833, 0
        %v836 = vperm.slane %v833, 1
        %v839 = vmul.f32 %v800, %v835
        %v840 = vmul.f32 %v801, %v836
        %v841 = vmul.f32 %v802, %v835
        %v842 = vmul.f32 %v803, %v836
        %v843 = vmul.f32 %v804, %v835
        %v844 = vmul.f32 %v805, %v836
        %v845 = vmul.f32 %v806, %v835
        %v846 = vmul.f32 %v807, %v836
        %v847 = vmul.f32 %v808, %v835
        %v848 = vmul.f32 %v809, %v836
        %v849 = vmul.f32 %v810, %v835
        %v850 = vmul.f32 %v811, %v836
        %v851 = vmul.f32 %v812, %v835
        %v852 = vmul.f32 %v813, %v836
        %v853 = vmul.f32 %v814, %v835
        %v854 = vmul.f32 %v815, %v836
        %v855 = vmul.f32 %v816, %v835
        %v856 = vmul.f32 %v817, %v836
        %v857 = vmul.f32 %v818, %v835
        %v858 = vmul.f32 %v819, %v836
        %v859 = vmul.f32 %v820, %v835
        %v860 = vmul.f32 %v821, %v836
        %v861 = vmul.f32 %v822, %v835
        %v862 = vmul.f32 %v823, %v836
        %v863 = vmul.f32 %v824, %v835
        %v864 = vmul.f32 %v825, %v836
        %v865 = vmul.f32 %v826, %v835
        %v866 = vmul.f32 %v827, %v836
        %v867 = vmul.f32 %v828, %v835
        %v868 = vmul.f32 %v829, %v836
        %v869 = vmul.f32 %v830, %v835
        %v870 = vmul.f32 %v831, %v836
        %s871 = scalar_lea.vmem %s394, 2 [#allocation10]
        %v872 = vld [vmem:[%s871] ss:$8 sm:$0x3]
        %v874 = vperm.slane %v872, 0
        %v875 = vperm.slane %v872, 1
        %v878 = vsub.f32 %v839, %v874
        %v879 = vsub.f32 %v840, %v875
        %v880 = vsub.f32 %v841, %v874
        %v881 = vsub.f32 %v842, %v875
        %v882 = vsub.f32 %v843, %v874
        %v883 = vsub.f32 %v844, %v875
        %v884 = vsub.f32 %v845, %v874
        %v885 = vsub.f32 %v846, %v875
        %v886 = vsub.f32 %v847, %v874
        %v887 = vsub.f32 %v848, %v875
        %v888 = vsub.f32 %v849, %v874
        %v889 = vsub.f32 %v850, %v875
        %v890 = vsub.f32 %v851, %v874
        %v891 = vsub.f32 %v852, %v875
        %v892 = vsub.f32 %v853, %v874
        %v893 = vsub.f32 %v854, %v875
        %v894 = vsub.f32 %v855, %v874
        %v895 = vsub.f32 %v856, %v875
        %v896 = vsub.f32 %v857, %v874
        %v897 = vsub.f32 %v858, %v875
        %v898 = vsub.f32 %v859, %v874
        %v899 = vsub.f32 %v860, %v875
        %v900 = vsub.f32 %v861, %v874
        %v901 = vsub.f32 %v862, %v875
        %v902 = vsub.f32 %v863, %v874
        %v903 = vsub.f32 %v864, %v875
        %v904 = vsub.f32 %v865, %v874
        %v905 = vsub.f32 %v866, %v875
        %v906 = vsub.f32 %v867, %v874
        %v907 = vsub.f32 %v868, %v875
        %v908 = vsub.f32 %v869, %v874
        %v909 = vsub.f32 %v870, %v875
        %v910 = vpack.c.bf16 %v879, %v878
        %v911 = vpack.c.bf16 %v881, %v880
        %v912 = vpack.c.bf16 %v883, %v882
        %v913 = vpack.c.bf16 %v885, %v884
        %v914 = vpack.c.bf16 %v887, %v886
        %v915 = vpack.c.bf16 %v889, %v888
        %v916 = vpack.c.bf16 %v891, %v890
        %v917 = vpack.c.bf16 %v893, %v892
        %v918 = vpack.c.bf16 %v895, %v894
        %v919 = vpack.c.bf16 %v897, %v896
        %v920 = vpack.c.bf16 %v899, %v898
        %v921 = vpack.c.bf16 %v901, %v900
        %v922 = vpack.c.bf16 %v903, %v902
        %v923 = vpack.c.bf16 %v905, %v904
        %v924 = vpack.c.bf16 %v907, %v906
        %v925 = vpack.c.bf16 %v909, %v908
        %926 = vst [vmem:[#allocation2 + $0x100] sm:$0xff] %v910
        %927 = vst [vmem:[#allocation2 + $0x108] sm:$0xff] %v911
        %928 = vst [vmem:[#allocation2 + $0x110] sm:$0xff] %v912
        %929 = vst [vmem:[#allocation2 + $0x118] sm:$0xff] %v913
        %930 = vst [vmem:[#allocation2 + $0x120] sm:$0xff] %v914
        %931 = vst [vmem:[#allocation2 + $0x128] sm:$0xff] %v915
        %932 = vst [vmem:[#allocation2 + $0x130] sm:$0xff] %v916
        %933 = vst [vmem:[#allocation2 + $0x138] sm:$0xff] %v917
        %934 = vst [vmem:[#allocation2 + $0x140] sm:$0xff] %v918
        %935 = vst [vmem:[#allocation2 + $0x148] sm:$0xff] %v919
        %936 = vst [vmem:[#allocation2 + $0x150] sm:$0xff] %v920
        %937 = vst [vmem:[#allocation2 + $0x158] sm:$0xff] %v921
        %938 = vst [vmem:[#allocation2 + $0x160] sm:$0xff] %v922
        %939 = vst [vmem:[#allocation2 + $0x168] sm:$0xff] %v923
        %940 = vst [vmem:[#allocation2 + $0x170] sm:$0xff] %v924
        %941 = vst [vmem:[#allocation2 + $0x178] sm:$0xff] %v925
        %v942 = vld [vmem:[%s374 + $0x180] sm:$0xff]
        %v943 = vld [vmem:[%s374 + $0x188] sm:$0xff]
        %v944 = vld [vmem:[%s374 + $0x190] sm:$0xff]
        %v945 = vld [vmem:[%s374 + $0x198] sm:$0xff]
        %v946 = vld [vmem:[%s374 + $0x1a0] sm:$0xff]
        %v947 = vld [vmem:[%s374 + $0x1a8] sm:$0xff]
        %v948 = vld [vmem:[%s374 + $0x1b0] sm:$0xff]
        %v949 = vld [vmem:[%s374 + $0x1b8] sm:$0xff]
        %v950 = vld [vmem:[%s374 + $0x1c0] sm:$0xff]
        %v951 = vld [vmem:[%s374 + $0x1c8] sm:$0xff]
        %v952 = vld [vmem:[%s374 + $0x1d0] sm:$0xff]
        %v953 = vld [vmem:[%s374 + $0x1d8] sm:$0xff]
        %v954 = vld [vmem:[%s374 + $0x1e0] sm:$0xff]
        %v955 = vld [vmem:[%s374 + $0x1e8] sm:$0xff]
        %v956 = vld [vmem:[%s374 + $0x1f0] sm:$0xff]
        %v957 = vld [vmem:[%s374 + $0x1f8] sm:$0xff]
        %v958 = vunpack.c.l.bf16 %v942
        %v959 = vunpack.c.h.bf16 %v942
        %v960 = vunpack.c.l.bf16 %v943
        %v961 = vunpack.c.h.bf16 %v943
        %v962 = vunpack.c.l.bf16 %v944
        %v963 = vunpack.c.h.bf16 %v944
        %v964 = vunpack.c.l.bf16 %v945
        %v965 = vunpack.c.h.bf16 %v945
        %v966 = vunpack.c.l.bf16 %v946
        %v967 = vunpack.c.h.bf16 %v946
        %v968 = vunpack.c.l.bf16 %v947
        %v969 = vunpack.c.h.bf16 %v947
        %v970 = vunpack.c.l.bf16 %v948
        %v971 = vunpack.c.h.bf16 %v948
        %v972 = vunpack.c.l.bf16 %v949
        %v973 = vunpack.c.h.bf16 %v949
        %v974 = vunpack.c.l.bf16 %v950
        %v975 = vunpack.c.h.bf16 %v950
        %v976 = vunpack.c.l.bf16 %v951
        %v977 = vunpack.c.h.bf16 %v951
        %v978 = vunpack.c.l.bf16 %v952
        %v979 = vunpack.c.h.bf16 %v952
        %v980 = vunpack.c.l.bf16 %v953
        %v981 = vunpack.c.h.bf16 %v953
        %v982 = vunpack.c.l.bf16 %v954
        %v983 = vunpack.c.h.bf16 %v954
        %v984 = vunpack.c.l.bf16 %v955
        %v985 = vunpack.c.h.bf16 %v955
        %v986 = vunpack.c.l.bf16 %v956
        %v987 = vunpack.c.h.bf16 %v956
        %v988 = vunpack.c.l.bf16 %v957
        %v989 = vunpack.c.h.bf16 %v957
        %s990 = scalar_lea.vmem %s384, 3 [#allocation9]
        %v991 = vld [vmem:[%s990] ss:$8 sm:$0x3]
        %v993 = vperm.slane %v991, 0
        %v994 = vperm.slane %v991, 1
        %v997 = vmul.f32 %v958, %v993
        %v998 = vmul.f32 %v959, %v994
        %v999 = vmul.f32 %v960, %v993
        %v1000 = vmul.f32 %v961, %v994
        %v1001 = vmul.f32 %v962, %v993
        %v1002 = vmul.f32 %v963, %v994
        %v1003 = vmul.f32 %v964, %v993
        %v1004 = vmul.f32 %v965, %v994
        %v1005 = vmul.f32 %v966, %v993
        %v1006 = vmul.f32 %v967, %v994
        %v1007 = vmul.f32 %v968, %v993
        %v1008 = vmul.f32 %v969, %v994
        %v1009 = vmul.f32 %v970, %v993
        %v1010 = vmul.f32 %v971, %v994
        %v1011 = vmul.f32 %v972, %v993
        %v1012 = vmul.f32 %v973, %v994
        %v1013 = vmul.f32 %v974, %v993
        %v1014 = vmul.f32 %v975, %v994
        %v1015 = vmul.f32 %v976, %v993
        %v1016 = vmul.f32 %v977, %v994
        %v1017 = vmul.f32 %v978, %v993
        %v1018 = vmul.f32 %v979, %v994
        %v1019 = vmul.f32 %v980, %v993
        %v1020 = vmul.f32 %v981, %v994
        %v1021 = vmul.f32 %v982, %v993
        %v1022 = vmul.f32 %v983, %v994
        %v1023 = vmul.f32 %v984, %v993
        %v1024 = vmul.f32 %v985, %v994
        %v1025 = vmul.f32 %v986, %v993
        %v1026 = vmul.f32 %v987, %v994
        %v1027 = vmul.f32 %v988, %v993
        %v1028 = vmul.f32 %v989, %v994
        %s1029 = scalar_lea.vmem %s394, 3 [#allocation10]
        %v1030 = vld [vmem:[%s1029] ss:$8 sm:$0x3]
        %v1032 = vperm.slane %v1030, 0
        %v1033 = vperm.slane %v1030, 1
        %v1036 = vsub.f32 %v997, %v1032
        %v1037 = vsub.f32 %v998, %v1033
        %v1038 = vsub.f32 %v999, %v1032
        %v1039 = vsub.f32 %v1000, %v1033
        %v1040 = vsub.f32 %v1001, %v1032
        %v1041 = vsub.f32 %v1002, %v1033
        %v1042 = vsub.f32 %v1003, %v1032
        %v1043 = vsub.f32 %v1004, %v1033
        %v1044 = vsub.f32 %v1005, %v1032
        %v1045 = vsub.f32 %v1006, %v1033
        %v1046 = vsub.f32 %v1007, %v1032
        %v1047 = vsub.f32 %v1008, %v1033
        %v1048 = vsub.f32 %v1009, %v1032
        %v1049 = vsub.f32 %v1010, %v1033
        %v1050 = vsub.f32 %v1011, %v1032
        %v1051 = vsub.f32 %v1012, %v1033
        %v1052 = vsub.f32 %v1013, %v1032
        %v1053 = vsub.f32 %v1014, %v1033
        %v1054 = vsub.f32 %v1015, %v1032
        %v1055 = vsub.f32 %v1016, %v1033
        %v1056 = vsub.f32 %v1017, %v1032
        %v1057 = vsub.f32 %v1018, %v1033
        %v1058 = vsub.f32 %v1019, %v1032
        %v1059 = vsub.f32 %v1020, %v1033
        %v1060 = vsub.f32 %v1021, %v1032
        %v1061 = vsub.f32 %v1022, %v1033
        %v1062 = vsub.f32 %v1023, %v1032
        %v1063 = vsub.f32 %v1024, %v1033
        %v1064 = vsub.f32 %v1025, %v1032
        %v1065 = vsub.f32 %v1026, %v1033
        %v1066 = vsub.f32 %v1027, %v1032
        %v1067 = vsub.f32 %v1028, %v1033
        %v1068 = vpack.c.bf16 %v1037, %v1036
        %v1069 = vpack.c.bf16 %v1039, %v1038
        %v1070 = vpack.c.bf16 %v1041, %v1040
        %v1071 = vpack.c.bf16 %v1043, %v1042
        %v1072 = vpack.c.bf16 %v1045, %v1044
        %v1073 = vpack.c.bf16 %v1047, %v1046
        %v1074 = vpack.c.bf16 %v1049, %v1048
        %v1075 = vpack.c.bf16 %v1051, %v1050
        %v1076 = vpack.c.bf16 %v1053, %v1052
        %v1077 = vpack.c.bf16 %v1055, %v1054
        %v1078 = vpack.c.bf16 %v1057, %v1056
        %v1079 = vpack.c.bf16 %v1059, %v1058
        %v1080 = vpack.c.bf16 %v1061, %v1060
        %v1081 = vpack.c.bf16 %v1063, %v1062
        %v1082 = vpack.c.bf16 %v1065, %v1064
        %v1083 = vpack.c.bf16 %v1067, %v1066
        %1084 = vst [vmem:[#allocation2 + $0x180] sm:$0xff] %v1068
        %1085 = vst [vmem:[#allocation2 + $0x188] sm:$0xff] %v1069
        %1086 = vst [vmem:[#allocation2 + $0x190] sm:$0xff] %v1070
        %1087 = vst [vmem:[#allocation2 + $0x198] sm:$0xff] %v1071
        %1088 = vst [vmem:[#allocation2 + $0x1a0] sm:$0xff] %v1072
        %1089 = vst [vmem:[#allocation2 + $0x1a8] sm:$0xff] %v1073
        %1090 = vst [vmem:[#allocation2 + $0x1b0] sm:$0xff] %v1074
        %1091 = vst [vmem:[#allocation2 + $0x1b8] sm:$0xff] %v1075
        %1092 = vst [vmem:[#allocation2 + $0x1c0] sm:$0xff] %v1076
        %1093 = vst [vmem:[#allocation2 + $0x1c8] sm:$0xff] %v1077
        %1094 = vst [vmem:[#allocation2 + $0x1d0] sm:$0xff] %v1078
        %1095 = vst [vmem:[#allocation2 + $0x1d8] sm:$0xff] %v1079
        %1096 = vst [vmem:[#allocation2 + $0x1e0] sm:$0xff] %v1080
        %1097 = vst [vmem:[#allocation2 + $0x1e8] sm:$0xff] %v1081
        %1098 = vst [vmem:[#allocation2 + $0x1f0] sm:$0xff] %v1082
        %1099 = vst [vmem:[#allocation2 + $0x1f8] sm:$0xff] %v1083
        %v1100 = vld [vmem:[%s374 + $0x200] sm:$0xff]
        %v1101 = vld [vmem:[%s374 + $0x208] sm:$0xff]
        %v1102 = vld [vmem:[%s374 + $0x210] sm:$0xff]
        %v1103 = vld [vmem:[%s374 + $0x218] sm:$0xff]
        %v1104 = vld [vmem:[%s374 + $0x220] sm:$0xff]
        %v1105 = vld [vmem:[%s374 + $0x228] sm:$0xff]
        %v1106 = vld [vmem:[%s374 + $0x230] sm:$0xff]
        %v1107 = vld [vmem:[%s374 + $0x238] sm:$0xff]
        %v1108 = vld [vmem:[%s374 + $0x240] sm:$0xff]
        %v1109 = vld [vmem:[%s374 + $0x248] sm:$0xff]
        %v1110 = vld [vmem:[%s374 + $0x250] sm:$0xff]
        %v1111 = vld [vmem:[%s374 + $0x258] sm:$0xff]
        %v1112 = vld [vmem:[%s374 + $0x260] sm:$0xff]
        %v1113 = vld [vmem:[%s374 + $0x268] sm:$0xff]
        %v1114 = vld [vmem:[%s374 + $0x270] sm:$0xff]
        %v1115 = vld [vmem:[%s374 + $0x278] sm:$0xff]
        %v1116 = vunpack.c.l.bf16 %v1100
        %v1117 = vunpack.c.h.bf16 %v1100
        %v1118 = vunpack.c.l.bf16 %v1101
        %v1119 = vunpack.c.h.bf16 %v1101
        %v1120 = vunpack.c.l.bf16 %v1102
        %v1121 = vunpack.c.h.bf16 %v1102
        %v1122 = vunpack.c.l.bf16 %v1103
        %v1123 = vunpack.c.h.bf16 %v1103
        %v1124 = vunpack.c.l.bf16 %v1104
        %v1125 = vunpack.c.h.bf16 %v1104
        %v1126 = vunpack.c.l.bf16 %v1105
        %v1127 = vunpack.c.h.bf16 %v1105
        %v1128 = vunpack.c.l.bf16 %v1106
        %v1129 = vunpack.c.h.bf16 %v1106
        %v1130 = vunpack.c.l.bf16 %v1107
        %v1131 = vunpack.c.h.bf16 %v1107
        %v1132 = vunpack.c.l.bf16 %v1108
        %v1133 = vunpack.c.h.bf16 %v1108
        %v1134 = vunpack.c.l.bf16 %v1109
        %v1135 = vunpack.c.h.bf16 %v1109
        %v1136 = vunpack.c.l.bf16 %v1110
        %v1137 = vunpack.c.h.bf16 %v1110
        %v1138 = vunpack.c.l.bf16 %v1111
        %v1139 = vunpack.c.h.bf16 %v1111
        %v1140 = vunpack.c.l.bf16 %v1112
        %v1141 = vunpack.c.h.bf16 %v1112
        %v1142 = vunpack.c.l.bf16 %v1113
        %v1143 = vunpack.c.h.bf16 %v1113
        %v1144 = vunpack.c.l.bf16 %v1114
        %v1145 = vunpack.c.h.bf16 %v1114
        %v1146 = vunpack.c.l.bf16 %v1115
        %v1147 = vunpack.c.h.bf16 %v1115
        %s1148 = scalar_lea.vmem %s384, 4 [#allocation9]
        %v1149 = vld [vmem:[%s1148] ss:$8 sm:$0x3]
        %v1151 = vperm.slane %v1149, 0
        %v1152 = vperm.slane %v1149, 1
        %v1155 = vmul.f32 %v1116, %v1151
        %v1156 = vmul.f32 %v1117, %v1152
        %v1157 = vmul.f32 %v1118, %v1151
        %v1158 = vmul.f32 %v1119, %v1152
        %v1159 = vmul.f32 %v1120, %v1151
        %v1160 = vmul.f32 %v1121, %v1152
        %v1161 = vmul.f32 %v1122, %v1151
        %v1162 = vmul.f32 %v1123, %v1152
        %v1163 = vmul.f32 %v1124, %v1151
        %v1164 = vmul.f32 %v1125, %v1152
        %v1165 = vmul.f32 %v1126, %v1151
        %v1166 = vmul.f32 %v1127, %v1152
        %v1167 = vmul.f32 %v1128, %v1151
        %v1168 = vmul.f32 %v1129, %v1152
        %v1169 = vmul.f32 %v1130, %v1151
        %v1170 = vmul.f32 %v1131, %v1152
        %v1171 = vmul.f32 %v1132, %v1151
        %v1172 = vmul.f32 %v1133, %v1152
        %v1173 = vmul.f32 %v1134, %v1151
        %v1174 = vmul.f32 %v1135, %v1152
        %v1175 = vmul.f32 %v1136, %v1151
        %v1176 = vmul.f32 %v1137, %v1152
        %v1177 = vmul.f32 %v1138, %v1151
        %v1178 = vmul.f32 %v1139, %v1152
        %v1179 = vmul.f32 %v1140, %v1151
        %v1180 = vmul.f32 %v1141, %v1152
        %v1181 = vmul.f32 %v1142, %v1151
        %v1182 = vmul.f32 %v1143, %v1152
        %v1183 = vmul.f32 %v1144, %v1151
        %v1184 = vmul.f32 %v1145, %v1152
        %v1185 = vmul.f32 %v1146, %v1151
        %v1186 = vmul.f32 %v1147, %v1152
        %s1187 = scalar_lea.vmem %s394, 4 [#allocation10]
        %v1188 = vld [vmem:[%s1187] ss:$8 sm:$0x3]
        %v1190 = vperm.slane %v1188, 0
        %v1191 = vperm.slane %v1188, 1
        %v1194 = vsub.f32 %v1155, %v1190
        %v1195 = vsub.f32 %v1156, %v1191
        %v1196 = vsub.f32 %v1157, %v1190
        %v1197 = vsub.f32 %v1158, %v1191
        %v1198 = vsub.f32 %v1159, %v1190
        %v1199 = vsub.f32 %v1160, %v1191
        %v1200 = vsub.f32 %v1161, %v1190
        %v1201 = vsub.f32 %v1162, %v1191
        %v1202 = vsub.f32 %v1163, %v1190
        %v1203 = vsub.f32 %v1164, %v1191
        %v1204 = vsub.f32 %v1165, %v1190
        %v1205 = vsub.f32 %v1166, %v1191
        %v1206 = vsub.f32 %v1167, %v1190
        %v1207 = vsub.f32 %v1168, %v1191
        %v1208 = vsub.f32 %v1169, %v1190
        %v1209 = vsub.f32 %v1170, %v1191
        %v1210 = vsub.f32 %v1171, %v1190
        %v1211 = vsub.f32 %v1172, %v1191
        %v1212 = vsub.f32 %v1173, %v1190
        %v1213 = vsub.f32 %v1174, %v1191
        %v1214 = vsub.f32 %v1175, %v1190
        %v1215 = vsub.f32 %v1176, %v1191
        %v1216 = vsub.f32 %v1177, %v1190
        %v1217 = vsub.f32 %v1178, %v1191
        %v1218 = vsub.f32 %v1179, %v1190
        %v1219 = vsub.f32 %v1180, %v1191
        %v1220 = vsub.f32 %v1181, %v1190
        %v1221 = vsub.f32 %v1182, %v1191
        %v1222 = vsub.f32 %v1183, %v1190
        %v1223 = vsub.f32 %v1184, %v1191
        %v1224 = vsub.f32 %v1185, %v1190
        %v1225 = vsub.f32 %v1186, %v1191
        %v1226 = vpack.c.bf16 %v1195, %v1194
        %v1227 = vpack.c.bf16 %v1197, %v1196
        %v1228 = vpack.c.bf16 %v1199, %v1198
        %v1229 = vpack.c.bf16 %v1201, %v1200
        %v1230 = vpack.c.bf16 %v1203, %v1202
        %v1231 = vpack.c.bf16 %v1205, %v1204
        %v1232 = vpack.c.bf16 %v1207, %v1206
        %v1233 = vpack.c.bf16 %v1209, %v1208
        %v1234 = vpack.c.bf16 %v1211, %v1210
        %v1235 = vpack.c.bf16 %v1213, %v1212
        %v1236 = vpack.c.bf16 %v1215, %v1214
        %v1237 = vpack.c.bf16 %v1217, %v1216
        %v1238 = vpack.c.bf16 %v1219, %v1218
        %v1239 = vpack.c.bf16 %v1221, %v1220
        %v1240 = vpack.c.bf16 %v1223, %v1222
        %v1241 = vpack.c.bf16 %v1225, %v1224
        %1242 = vst [vmem:[#allocation2 + $0x200] sm:$0xff] %v1226
        %1243 = vst [vmem:[#allocation2 + $0x208] sm:$0xff] %v1227
        %1244 = vst [vmem:[#allocation2 + $0x210] sm:$0xff] %v1228
        %1245 = vst [vmem:[#allocation2 + $0x218] sm:$0xff] %v1229
        %1246 = vst [vmem:[#allocation2 + $0x220] sm:$0xff] %v1230
        %1247 = vst [vmem:[#allocation2 + $0x228] sm:$0xff] %v1231
        %1248 = vst [vmem:[#allocation2 + $0x230] sm:$0xff] %v1232
        %1249 = vst [vmem:[#allocation2 + $0x238] sm:$0xff] %v1233
        %1250 = vst [vmem:[#allocation2 + $0x240] sm:$0xff] %v1234
        %1251 = vst [vmem:[#allocation2 + $0x248] sm:$0xff] %v1235
        %1252 = vst [vmem:[#allocation2 + $0x250] sm:$0xff] %v1236
        %1253 = vst [vmem:[#allocation2 + $0x258] sm:$0xff] %v1237
        %1254 = vst [vmem:[#allocation2 + $0x260] sm:$0xff] %v1238
        %1255 = vst [vmem:[#allocation2 + $0x268] sm:$0xff] %v1239
        %1256 = vst [vmem:[#allocation2 + $0x270] sm:$0xff] %v1240
        %1257 = vst [vmem:[#allocation2 + $0x278] sm:$0xff] %v1241
        %v1258 = vld [vmem:[%s374 + $0x280] sm:$0xff]
        %v1259 = vld [vmem:[%s374 + $0x288] sm:$0xff]
        %v1260 = vld [vmem:[%s374 + $0x290] sm:$0xff]
        %v1261 = vld [vmem:[%s374 + $0x298] sm:$0xff]
        %v1262 = vld [vmem:[%s374 + $0x2a0] sm:$0xff]
        %v1263 = vld [vmem:[%s374 + $0x2a8] sm:$0xff]
        %v1264 = vld [vmem:[%s374 + $0x2b0] sm:$0xff]
        %v1265 = vld [vmem:[%s374 + $0x2b8] sm:$0xff]
        %v1266 = vld [vmem:[%s374 + $0x2c0] sm:$0xff]
        %v1267 = vld [vmem:[%s374 + $0x2c8] sm:$0xff]
        %v1268 = vld [vmem:[%s374 + $0x2d0] sm:$0xff]
        %v1269 = vld [vmem:[%s374 + $0x2d8] sm:$0xff]
        %v1270 = vld [vmem:[%s374 + $0x2e0] sm:$0xff]
        %v1271 = vld [vmem:[%s374 + $0x2e8] sm:$0xff]
        %v1272 = vld [vmem:[%s374 + $0x2f0] sm:$0xff]
        %v1273 = vld [vmem:[%s374 + $0x2f8] sm:$0xff]
        %v1274 = vunpack.c.l.bf16 %v1258
        %v1275 = vunpack.c.h.bf16 %v1258
        %v1276 = vunpack.c.l.bf16 %v1259
        %v1277 = vunpack.c.h.bf16 %v1259
        %v1278 = vunpack.c.l.bf16 %v1260
        %v1279 = vunpack.c.h.bf16 %v1260
        %v1280 = vunpack.c.l.bf16 %v1261
        %v1281 = vunpack.c.h.bf16 %v1261
        %v1282 = vunpack.c.l.bf16 %v1262
        %v1283 = vunpack.c.h.bf16 %v1262
        %v1284 = vunpack.c.l.bf16 %v1263
        %v1285 = vunpack.c.h.bf16 %v1263
        %v1286 = vunpack.c.l.bf16 %v1264
        %v1287 = vunpack.c.h.bf16 %v1264
        %v1288 = vunpack.c.l.bf16 %v1265
        %v1289 = vunpack.c.h.bf16 %v1265
        %v1290 = vunpack.c.l.bf16 %v1266
        %v1291 = vunpack.c.h.bf16 %v1266
        %v1292 = vunpack.c.l.bf16 %v1267
        %v1293 = vunpack.c.h.bf16 %v1267
        %v1294 = vunpack.c.l.bf16 %v1268
        %v1295 = vunpack.c.h.bf16 %v1268
        %v1296 = vunpack.c.l.bf16 %v1269
        %v1297 = vunpack.c.h.bf16 %v1269
        %v1298 = vunpack.c.l.bf16 %v1270
        %v1299 = vunpack.c.h.bf16 %v1270
        %v1300 = vunpack.c.l.bf16 %v1271
        %v1301 = vunpack.c.h.bf16 %v1271
        %v1302 = vunpack.c.l.bf16 %v1272
        %v1303 = vunpack.c.h.bf16 %v1272
        %v1304 = vunpack.c.l.bf16 %v1273
        %v1305 = vunpack.c.h.bf16 %v1273
        %s1306 = scalar_lea.vmem %s384, 5 [#allocation9]
        %v1307 = vld [vmem:[%s1306] ss:$8 sm:$0x3]
        %v1309 = vperm.slane %v1307, 0
        %v1310 = vperm.slane %v1307, 1
        %v1313 = vmul.f32 %v1274, %v1309
        %v1314 = vmul.f32 %v1275, %v1310
        %v1315 = vmul.f32 %v1276, %v1309
        %v1316 = vmul.f32 %v1277, %v1310
        %v1317 = vmul.f32 %v1278, %v1309
        %v1318 = vmul.f32 %v1279, %v1310
        %v1319 = vmul.f32 %v1280, %v1309
        %v1320 = vmul.f32 %v1281, %v1310
        %v1321 = vmul.f32 %v1282, %v1309
        %v1322 = vmul.f32 %v1283, %v1310
        %v1323 = vmul.f32 %v1284, %v1309
        %v1324 = vmul.f32 %v1285, %v1310
        %v1325 = vmul.f32 %v1286, %v1309
        %v1326 = vmul.f32 %v1287, %v1310
        %v1327 = vmul.f32 %v1288, %v1309
        %v1328 = vmul.f32 %v1289, %v1310
        %v1329 = vmul.f32 %v1290, %v1309
        %v1330 = vmul.f32 %v1291, %v1310
        %v1331 = vmul.f32 %v1292, %v1309
        %v1332 = vmul.f32 %v1293, %v1310
        %v1333 = vmul.f32 %v1294, %v1309
        %v1334 = vmul.f32 %v1295, %v1310
        %v1335 = vmul.f32 %v1296, %v1309
        %v1336 = vmul.f32 %v1297, %v1310
        %v1337 = vmul.f32 %v1298, %v1309
        %v1338 = vmul.f32 %v1299, %v1310
        %v1339 = vmul.f32 %v1300, %v1309
        %v1340 = vmul.f32 %v1301, %v1310
        %v1341 = vmul.f32 %v1302, %v1309
        %v1342 = vmul.f32 %v1303, %v1310
        %v1343 = vmul.f32 %v1304, %v1309
        %v1344 = vmul.f32 %v1305, %v1310
        %s1345 = scalar_lea.vmem %s394, 5 [#allocation10]
        %v1346 = vld [vmem:[%s1345] ss:$8 sm:$0x3]
        %v1348 = vperm.slane %v1346, 0
        %v1349 = vperm.slane %v1346, 1
        %v1352 = vsub.f32 %v1313, %v1348
        %v1353 = vsub.f32 %v1314, %v1349
        %v1354 = vsub.f32 %v1315, %v1348
        %v1355 = vsub.f32 %v1316, %v1349
        %v1356 = vsub.f32 %v1317, %v1348
        %v1357 = vsub.f32 %v1318, %v1349
        %v1358 = vsub.f32 %v1319, %v1348
        %v1359 = vsub.f32 %v1320, %v1349
        %v1360 = vsub.f32 %v1321, %v1348
        %v1361 = vsub.f32 %v1322, %v1349
        %v1362 = vsub.f32 %v1323, %v1348
        %v1363 = vsub.f32 %v1324, %v1349
        %v1364 = vsub.f32 %v1325, %v1348
        %v1365 = vsub.f32 %v1326, %v1349
        %v1366 = vsub.f32 %v1327, %v1348
        %v1367 = vsub.f32 %v1328, %v1349
        %v1368 = vsub.f32 %v1329, %v1348
        %v1369 = vsub.f32 %v1330, %v1349
        %v1370 = vsub.f32 %v1331, %v1348
        %v1371 = vsub.f32 %v1332, %v1349
        %v1372 = vsub.f32 %v1333, %v1348
        %v1373 = vsub.f32 %v1334, %v1349
        %v1374 = vsub.f32 %v1335, %v1348
        %v1375 = vsub.f32 %v1336, %v1349
        %v1376 = vsub.f32 %v1337, %v1348
        %v1377 = vsub.f32 %v1338, %v1349
        %v1378 = vsub.f32 %v1339, %v1348
        %v1379 = vsub.f32 %v1340, %v1349
        %v1380 = vsub.f32 %v1341, %v1348
        %v1381 = vsub.f32 %v1342, %v1349
        %v1382 = vsub.f32 %v1343, %v1348
        %v1383 = vsub.f32 %v1344, %v1349
        %v1384 = vpack.c.bf16 %v1353, %v1352
        %v1385 = vpack.c.bf16 %v1355, %v1354
        %v1386 = vpack.c.bf16 %v1357, %v1356
        %v1387 = vpack.c.bf16 %v1359, %v1358
        %v1388 = vpack.c.bf16 %v1361, %v1360
        %v1389 = vpack.c.bf16 %v1363, %v1362
        %v1390 = vpack.c.bf16 %v1365, %v1364
        %v1391 = vpack.c.bf16 %v1367, %v1366
        %v1392 = vpack.c.bf16 %v1369, %v1368
        %v1393 = vpack.c.bf16 %v1371, %v1370
        %v1394 = vpack.c.bf16 %v1373, %v1372
        %v1395 = vpack.c.bf16 %v1375, %v1374
        %v1396 = vpack.c.bf16 %v1377, %v1376
        %v1397 = vpack.c.bf16 %v1379, %v1378
        %v1398 = vpack.c.bf16 %v1381, %v1380
        %v1399 = vpack.c.bf16 %v1383, %v1382
        %1400 = vst [vmem:[#allocation2 + $0x280] sm:$0xff] %v1384
        %1401 = vst [vmem:[#allocation2 + $0x288] sm:$0xff] %v1385
        %1402 = vst [vmem:[#allocation2 + $0x290] sm:$0xff] %v1386
        %1403 = vst [vmem:[#allocation2 + $0x298] sm:$0xff] %v1387
        %1404 = vst [vmem:[#allocation2 + $0x2a0] sm:$0xff] %v1388
        %1405 = vst [vmem:[#allocation2 + $0x2a8] sm:$0xff] %v1389
        %1406 = vst [vmem:[#allocation2 + $0x2b0] sm:$0xff] %v1390
        %1407 = vst [vmem:[#allocation2 + $0x2b8] sm:$0xff] %v1391
        %1408 = vst [vmem:[#allocation2 + $0x2c0] sm:$0xff] %v1392
        %1409 = vst [vmem:[#allocation2 + $0x2c8] sm:$0xff] %v1393
        %1410 = vst [vmem:[#allocation2 + $0x2d0] sm:$0xff] %v1394
        %1411 = vst [vmem:[#allocation2 + $0x2d8] sm:$0xff] %v1395
        %1412 = vst [vmem:[#allocation2 + $0x2e0] sm:$0xff] %v1396
        %1413 = vst [vmem:[#allocation2 + $0x2e8] sm:$0xff] %v1397
        %1414 = vst [vmem:[#allocation2 + $0x2f0] sm:$0xff] %v1398
        %1415 = vst [vmem:[#allocation2 + $0x2f8] sm:$0xff] %v1399
        %v1416 = vld [vmem:[%s374 + $0x300] sm:$0xff]
        %v1417 = vld [vmem:[%s374 + $0x308] sm:$0xff]
        %v1418 = vld [vmem:[%s374 + $0x310] sm:$0xff]
        %v1419 = vld [vmem:[%s374 + $0x318] sm:$0xff]
        %v1420 = vld [vmem:[%s374 + $0x320] sm:$0xff]
        %v1421 = vld [vmem:[%s374 + $0x328] sm:$0xff]
        %v1422 = vld [vmem:[%s374 + $0x330] sm:$0xff]
        %v1423 = vld [vmem:[%s374 + $0x338] sm:$0xff]
        %v1424 = vld [vmem:[%s374 + $0x340] sm:$0xff]
        %v1425 = vld [vmem:[%s374 + $0x348] sm:$0xff]
        %v1426 = vld [vmem:[%s374 + $0x350] sm:$0xff]
        %v1427 = vld [vmem:[%s374 + $0x358] sm:$0xff]
        %v1428 = vld [vmem:[%s374 + $0x360] sm:$0xff]
        %v1429 = vld [vmem:[%s374 + $0x368] sm:$0xff]
        %v1430 = vld [vmem:[%s374 + $0x370] sm:$0xff]
        %v1431 = vld [vmem:[%s374 + $0x378] sm:$0xff]
        %v1432 = vunpack.c.l.bf16 %v1416
        %v1433 = vunpack.c.h.bf16 %v1416
        %v1434 = vunpack.c.l.bf16 %v1417
        %v1435 = vunpack.c.h.bf16 %v1417
        %v1436 = vunpack.c.l.bf16 %v1418
        %v1437 = vunpack.c.h.bf16 %v1418
        %v1438 = vunpack.c.l.bf16 %v1419
        %v1439 = vunpack.c.h.bf16 %v1419
        %v1440 = vunpack.c.l.bf16 %v1420
        %v1441 = vunpack.c.h.bf16 %v1420
        %v1442 = vunpack.c.l.bf16 %v1421
        %v1443 = vunpack.c.h.bf16 %v1421
        %v1444 = vunpack.c.l.bf16 %v1422
        %v1445 = vunpack.c.h.bf16 %v1422
        %v1446 = vunpack.c.l.bf16 %v1423
        %v1447 = vunpack.c.h.bf16 %v1423
        %v1448 = vunpack.c.l.bf16 %v1424
        %v1449 = vunpack.c.h.bf16 %v1424
        %v1450 = vunpack.c.l.bf16 %v1425
        %v1451 = vunpack.c.h.bf16 %v1425
        %v1452 = vunpack.c.l.bf16 %v1426
        %v1453 = vunpack.c.h.bf16 %v1426
        %v1454 = vunpack.c.l.bf16 %v1427
        %v1455 = vunpack.c.h.bf16 %v1427
        %v1456 = vunpack.c.l.bf16 %v1428
        %v1457 = vunpack.c.h.bf16 %v1428
        %v1458 = vunpack.c.l.bf16 %v1429
        %v1459 = vunpack.c.h.bf16 %v1429
        %v1460 = vunpack.c.l.bf16 %v1430
        %v1461 = vunpack.c.h.bf16 %v1430
        %v1462 = vunpack.c.l.bf16 %v1431
        %v1463 = vunpack.c.h.bf16 %v1431
        %s1464 = scalar_lea.vmem %s384, 6 [#allocation9]
        %v1465 = vld [vmem:[%s1464] ss:$8 sm:$0x3]
        %v1467 = vperm.slane %v1465, 0
        %v1468 = vperm.slane %v1465, 1
        %v1471 = vmul.f32 %v1432, %v1467
        %v1472 = vmul.f32 %v1433, %v1468
        %v1473 = vmul.f32 %v1434, %v1467
        %v1474 = vmul.f32 %v1435, %v1468
        %v1475 = vmul.f32 %v1436, %v1467
        %v1476 = vmul.f32 %v1437, %v1468
        %v1477 = vmul.f32 %v1438, %v1467
        %v1478 = vmul.f32 %v1439, %v1468
        %v1479 = vmul.f32 %v1440, %v1467
        %v1480 = vmul.f32 %v1441, %v1468
        %v1481 = vmul.f32 %v1442, %v1467
        %v1482 = vmul.f32 %v1443, %v1468
        %v1483 = vmul.f32 %v1444, %v1467
        %v1484 = vmul.f32 %v1445, %v1468
        %v1485 = vmul.f32 %v1446, %v1467
        %v1486 = vmul.f32 %v1447, %v1468
        %v1487 = vmul.f32 %v1448, %v1467
        %v1488 = vmul.f32 %v1449, %v1468
        %v1489 = vmul.f32 %v1450, %v1467
        %v1490 = vmul.f32 %v1451, %v1468
        %v1491 = vmul.f32 %v1452, %v1467
        %v1492 = vmul.f32 %v1453, %v1468
        %v1493 = vmul.f32 %v1454, %v1467
        %v1494 = vmul.f32 %v1455, %v1468
        %v1495 = vmul.f32 %v1456, %v1467
        %v1496 = vmul.f32 %v1457, %v1468
        %v1497 = vmul.f32 %v1458, %v1467
        %v1498 = vmul.f32 %v1459, %v1468
        %v1499 = vmul.f32 %v1460, %v1467
        %v1500 = vmul.f32 %v1461, %v1468
        %v1501 = vmul.f32 %v1462, %v1467
        %v1502 = vmul.f32 %v1463, %v1468
        %s1503 = scalar_lea.vmem %s394, 6 [#allocation10]
        %v1504 = vld [vmem:[%s1503] ss:$8 sm:$0x3]
        %v1506 = vperm.slane %v1504, 0
        %v1507 = vperm.slane %v1504, 1
        %v1510 = vsub.f32 %v1471, %v1506
        %v1511 = vsub.f32 %v1472, %v1507
        %v1512 = vsub.f32 %v1473, %v1506
        %v1513 = vsub.f32 %v1474, %v1507
        %v1514 = vsub.f32 %v1475, %v1506
        %v1515 = vsub.f32 %v1476, %v1507
        %v1516 = vsub.f32 %v1477, %v1506
        %v1517 = vsub.f32 %v1478, %v1507
        %v1518 = vsub.f32 %v1479, %v1506
        %v1519 = vsub.f32 %v1480, %v1507
        %v1520 = vsub.f32 %v1481, %v1506
        %v1521 = vsub.f32 %v1482, %v1507
        %v1522 = vsub.f32 %v1483, %v1506
        %v1523 = vsub.f32 %v1484, %v1507
        %v1524 = vsub.f32 %v1485, %v1506
        %v1525 = vsub.f32 %v1486, %v1507
        %v1526 = vsub.f32 %v1487, %v1506
        %v1527 = vsub.f32 %v1488, %v1507
        %v1528 = vsub.f32 %v1489, %v1506
        %v1529 = vsub.f32 %v1490, %v1507
        %v1530 = vsub.f32 %v1491, %v1506
        %v1531 = vsub.f32 %v1492, %v1507
        %v1532 = vsub.f32 %v1493, %v1506
        %v1533 = vsub.f32 %v1494, %v1507
        %v1534 = vsub.f32 %v1495, %v1506
        %v1535 = vsub.f32 %v1496, %v1507
        %v1536 = vsub.f32 %v1497, %v1506
        %v1537 = vsub.f32 %v1498, %v1507
        %v1538 = vsub.f32 %v1499, %v1506
        %v1539 = vsub.f32 %v1500, %v1507
        %v1540 = vsub.f32 %v1501, %v1506
        %v1541 = vsub.f32 %v1502, %v1507
        %v1542 = vpack.c.bf16 %v1511, %v1510
        %v1543 = vpack.c.bf16 %v1513, %v1512
        %v1544 = vpack.c.bf16 %v1515, %v1514
        %v1545 = vpack.c.bf16 %v1517, %v1516
        %v1546 = vpack.c.bf16 %v1519, %v1518
        %v1547 = vpack.c.bf16 %v1521, %v1520
        %v1548 = vpack.c.bf16 %v1523, %v1522
        %v1549 = vpack.c.bf16 %v1525, %v1524
        %v1550 = vpack.c.bf16 %v1527, %v1526
        %v1551 = vpack.c.bf16 %v1529, %v1528
        %v1552 = vpack.c.bf16 %v1531, %v1530
        %v1553 = vpack.c.bf16 %v1533, %v1532
        %v1554 = vpack.c.bf16 %v1535, %v1534
        %v1555 = vpack.c.bf16 %v1537, %v1536
        %v1556 = vpack.c.bf16 %v1539, %v1538
        %v1557 = vpack.c.bf16 %v1541, %v1540
        %1558 = vst [vmem:[#allocation2 + $0x300] sm:$0xff] %v1542
        %1559 = vst [vmem:[#allocation2 + $0x308] sm:$0xff] %v1543
        %1560 = vst [vmem:[#allocation2 + $0x310] sm:$0xff] %v1544
        %1561 = vst [vmem:[#allocation2 + $0x318] sm:$0xff] %v1545
        %1562 = vst [vmem:[#allocation2 + $0x320] sm:$0xff] %v1546
        %1563 = vst [vmem:[#allocation2 + $0x328] sm:$0xff] %v1547
        %1564 = vst [vmem:[#allocation2 + $0x330] sm:$0xff] %v1548
        %1565 = vst [vmem:[#allocation2 + $0x338] sm:$0xff] %v1549
        %1566 = vst [vmem:[#allocation2 + $0x340] sm:$0xff] %v1550
        %1567 = vst [vmem:[#allocation2 + $0x348] sm:$0xff] %v1551
        %1568 = vst [vmem:[#allocation2 + $0x350] sm:$0xff] %v1552
        %1569 = vst [vmem:[#allocation2 + $0x358] sm:$0xff] %v1553
        %1570 = vst [vmem:[#allocation2 + $0x360] sm:$0xff] %v1554
        %1571 = vst [vmem:[#allocation2 + $0x368] sm:$0xff] %v1555
        %1572 = vst [vmem:[#allocation2 + $0x370] sm:$0xff] %v1556
        %1573 = vst [vmem:[#allocation2 + $0x378] sm:$0xff] %v1557
        %v1574 = vld [vmem:[%s374 + $0x380] sm:$0xff]
        %v1575 = vld [vmem:[%s374 + $0x388] sm:$0xff]
        %v1576 = vld [vmem:[%s374 + $0x390] sm:$0xff]
        %v1577 = vld [vmem:[%s374 + $0x398] sm:$0xff]
        %v1578 = vld [vmem:[%s374 + $0x3a0] sm:$0xff]
        %v1579 = vld [vmem:[%s374 + $0x3a8] sm:$0xff]
        %v1580 = vld [vmem:[%s374 + $0x3b0] sm:$0xff]
        %v1581 = vld [vmem:[%s374 + $0x3b8] sm:$0xff]
        %v1582 = vld [vmem:[%s374 + $0x3c0] sm:$0xff]
        %v1583 = vld [vmem:[%s374 + $0x3c8] sm:$0xff]
        %v1584 = vld [vmem:[%s374 + $0x3d0] sm:$0xff]
        %v1585 = vld [vmem:[%s374 + $0x3d8] sm:$0xff]
        %v1586 = vld [vmem:[%s374 + $0x3e0] sm:$0xff]
        %v1587 = vld [vmem:[%s374 + $0x3e8] sm:$0xff]
        %v1588 = vld [vmem:[%s374 + $0x3f0] sm:$0xff]
        %v1589 = vld [vmem:[%s374 + $0x3f8] sm:$0xff]
        %v1590 = vunpack.c.l.bf16 %v1574
        %v1591 = vunpack.c.h.bf16 %v1574
        %v1592 = vunpack.c.l.bf16 %v1575
        %v1593 = vunpack.c.h.bf16 %v1575
        %v1594 = vunpack.c.l.bf16 %v1576
        %v1595 = vunpack.c.h.bf16 %v1576
        %v1596 = vunpack.c.l.bf16 %v1577
        %v1597 = vunpack.c.h.bf16 %v1577
        %v1598 = vunpack.c.l.bf16 %v1578
        %v1599 = vunpack.c.h.bf16 %v1578
        %v1600 = vunpack.c.l.bf16 %v1579
        %v1601 = vunpack.c.h.bf16 %v1579
        %v1602 = vunpack.c.l.bf16 %v1580
        %v1603 = vunpack.c.h.bf16 %v1580
        %v1604 = vunpack.c.l.bf16 %v1581
        %v1605 = vunpack.c.h.bf16 %v1581
        %v1606 = vunpack.c.l.bf16 %v1582
        %v1607 = vunpack.c.h.bf16 %v1582
        %v1608 = vunpack.c.l.bf16 %v1583
        %v1609 = vunpack.c.h.bf16 %v1583
        %v1610 = vunpack.c.l.bf16 %v1584
        %v1611 = vunpack.c.h.bf16 %v1584
        %v1612 = vunpack.c.l.bf16 %v1585
        %v1613 = vunpack.c.h.bf16 %v1585
        %v1614 = vunpack.c.l.bf16 %v1586
        %v1615 = vunpack.c.h.bf16 %v1586
        %v1616 = vunpack.c.l.bf16 %v1587
        %v1617 = vunpack.c.h.bf16 %v1587
        %v1618 = vunpack.c.l.bf16 %v1588
        %v1619 = vunpack.c.h.bf16 %v1588
        %v1620 = vunpack.c.l.bf16 %v1589
        %v1621 = vunpack.c.h.bf16 %v1589
        %s1622 = scalar_lea.vmem %s384, 7 [#allocation9]
        %v1623 = vld [vmem:[%s1622] ss:$8 sm:$0x3]
        %v1625 = vperm.slane %v1623, 0
        %v1626 = vperm.slane %v1623, 1
        %v1629 = vmul.f32 %v1590, %v1625
        %v1630 = vmul.f32 %v1591, %v1626
        %v1631 = vmul.f32 %v1592, %v1625
        %v1632 = vmul.f32 %v1593, %v1626
        %v1633 = vmul.f32 %v1594, %v1625
        %v1634 = vmul.f32 %v1595, %v1626
        %v1635 = vmul.f32 %v1596, %v1625
        %v1636 = vmul.f32 %v1597, %v1626
        %v1637 = vmul.f32 %v1598, %v1625
        %v1638 = vmul.f32 %v1599, %v1626
        %v1639 = vmul.f32 %v1600, %v1625
        %v1640 = vmul.f32 %v1601, %v1626
        %v1641 = vmul.f32 %v1602, %v1625
        %v1642 = vmul.f32 %v1603, %v1626
        %v1643 = vmul.f32 %v1604, %v1625
        %v1644 = vmul.f32 %v1605, %v1626
        %v1645 = vmul.f32 %v1606, %v1625
        %v1646 = vmul.f32 %v1607, %v1626
        %v1647 = vmul.f32 %v1608, %v1625
        %v1648 = vmul.f32 %v1609, %v1626
        %v1649 = vmul.f32 %v1610, %v1625
        %v1650 = vmul.f32 %v1611, %v1626
        %v1651 = vmul.f32 %v1612, %v1625
        %v1652 = vmul.f32 %v1613, %v1626
        %v1653 = vmul.f32 %v1614, %v1625
        %v1654 = vmul.f32 %v1615, %v1626
        %v1655 = vmul.f32 %v1616, %v1625
        %v1656 = vmul.f32 %v1617, %v1626
        %v1657 = vmul.f32 %v1618, %v1625
        %v1658 = vmul.f32 %v1619, %v1626
        %v1659 = vmul.f32 %v1620, %v1625
        %v1660 = vmul.f32 %v1621, %v1626
        %s1661 = scalar_lea.vmem %s394, 7 [#allocation10]
        %v1662 = vld [vmem:[%s1661] ss:$8 sm:$0x3]
        %v1664 = vperm.slane %v1662, 0
        %v1665 = vperm.slane %v1662, 1
        %v1668 = vsub.f32 %v1629, %v1664
        %v1669 = vsub.f32 %v1630, %v1665
        %v1670 = vsub.f32 %v1631, %v1664
        %v1671 = vsub.f32 %v1632, %v1665
        %v1672 = vsub.f32 %v1633, %v1664
        %v1673 = vsub.f32 %v1634, %v1665
        %v1674 = vsub.f32 %v1635, %v1664
        %v1675 = vsub.f32 %v1636, %v1665
        %v1676 = vsub.f32 %v1637, %v1664
        %v1677 = vsub.f32 %v1638, %v1665
        %v1678 = vsub.f32 %v1639, %v1664
        %v1679 = vsub.f32 %v1640, %v1665
        %v1680 = vsub.f32 %v1641, %v1664
        %v1681 = vsub.f32 %v1642, %v1665
        %v1682 = vsub.f32 %v1643, %v1664
        %v1683 = vsub.f32 %v1644, %v1665
        %v1684 = vsub.f32 %v1645, %v1664
        %v1685 = vsub.f32 %v1646, %v1665
        %v1686 = vsub.f32 %v1647, %v1664
        %v1687 = vsub.f32 %v1648, %v1665
        %v1688 = vsub.f32 %v1649, %v1664
        %v1689 = vsub.f32 %v1650, %v1665
        %v1690 = vsub.f32 %v1651, %v1664
        %v1691 = vsub.f32 %v1652, %v1665
        %v1692 = vsub.f32 %v1653, %v1664
        %v1693 = vsub.f32 %v1654, %v1665
        %v1694 = vsub.f32 %v1655, %v1664
        %v1695 = vsub.f32 %v1656, %v1665
        %v1696 = vsub.f32 %v1657, %v1664
        %v1697 = vsub.f32 %v1658, %v1665
        %v1698 = vsub.f32 %v1659, %v1664
        %v1699 = vsub.f32 %v1660, %v1665
        %v1700 = vpack.c.bf16 %v1669, %v1668
        %v1701 = vpack.c.bf16 %v1671, %v1670
        %v1702 = vpack.c.bf16 %v1673, %v1672
        %v1703 = vpack.c.bf16 %v1675, %v1674
        %v1704 = vpack.c.bf16 %v1677, %v1676
        %v1705 = vpack.c.bf16 %v1679, %v1678
        %v1706 = vpack.c.bf16 %v1681, %v1680
        %v1707 = vpack.c.bf16 %v1683, %v1682
        %v1708 = vpack.c.bf16 %v1685, %v1684
        %v1709 = vpack.c.bf16 %v1687, %v1686
        %v1710 = vpack.c.bf16 %v1689, %v1688
        %v1711 = vpack.c.bf16 %v1691, %v1690
        %v1712 = vpack.c.bf16 %v1693, %v1692
        %v1713 = vpack.c.bf16 %v1695, %v1694
        %v1714 = vpack.c.bf16 %v1697, %v1696
        %v1715 = vpack.c.bf16 %v1699, %v1698
        %1716 = vst [vmem:[#allocation2 + $0x380] sm:$0xff] %v1700
        %1717 = vst [vmem:[#allocation2 + $0x388] sm:$0xff] %v1701
        %1718 = vst [vmem:[#allocation2 + $0x390] sm:$0xff] %v1702
        %1719 = vst [vmem:[#allocation2 + $0x398] sm:$0xff] %v1703
        %1720 = vst [vmem:[#allocation2 + $0x3a0] sm:$0xff] %v1704
        %1721 = vst [vmem:[#allocation2 + $0x3a8] sm:$0xff] %v1705
        %1722 = vst [vmem:[#allocation2 + $0x3b0] sm:$0xff] %v1706
        %1723 = vst [vmem:[#allocation2 + $0x3b8] sm:$0xff] %v1707
        %1724 = vst [vmem:[#allocation2 + $0x3c0] sm:$0xff] %v1708
        %1725 = vst [vmem:[#allocation2 + $0x3c8] sm:$0xff] %v1709
        %1726 = vst [vmem:[#allocation2 + $0x3d0] sm:$0xff] %v1710
        %1727 = vst [vmem:[#allocation2 + $0x3d8] sm:$0xff] %v1711
        %1728 = vst [vmem:[#allocation2 + $0x3e0] sm:$0xff] %v1712
        %1729 = vst [vmem:[#allocation2 + $0x3e8] sm:$0xff] %v1713
        %1730 = vst [vmem:[#allocation2 + $0x3f0] sm:$0xff] %v1714
        %1731 = vst [vmem:[#allocation2 + $0x3f8] sm:$0xff] %v1715
        %v1732 = vld [vmem:[#allocation3] sm:$0xff]
        %v1733 = vld [vmem:[#allocation3 + $0x8] sm:$0xff]
        %v1734 = vld [vmem:[#allocation3 + $0x10] sm:$0xff]
        %v1735 = vld [vmem:[#allocation3 + $0x18] sm:$0xff]
        %v1736 = vld [vmem:[#allocation4] sm:$0xff]
        %v1737 = vld [vmem:[#allocation4 + $0x8] sm:$0xff]
        %v1738 = vld [vmem:[#allocation4 + $0x10] sm:$0xff]
        %v1739 = vld [vmem:[#allocation4 + $0x18] sm:$0xff]
        %v1740 = vld [vmem:[#allocation4 + $0x20] sm:$0xff]
        %v1741 = vld [vmem:[#allocation4 + $0x28] sm:$0xff]
        %v1742 = vld [vmem:[#allocation4 + $0x30] sm:$0xff]
        %v1743 = vld [vmem:[#allocation4 + $0x38] sm:$0xff]
        %v1744 = vld [vmem:[#allocation2] sm:$0xff]
        %v1745 = vld [vmem:[#allocation2 + $0x8] sm:$0xff]
        %v1746 = vld [vmem:[#allocation2 + $0x10] sm:$0xff]
        %v1747 = vld [vmem:[#allocation2 + $0x18] sm:$0xff]
        %v1748 = vld [vmem:[#allocation2 + $0x20] sm:$0xff]
        %v1749 = vld [vmem:[#allocation2 + $0x28] sm:$0xff]
        %v1750 = vld [vmem:[#allocation2 + $0x30] sm:$0xff]
        %v1751 = vld [vmem:[#allocation2 + $0x38] sm:$0xff]
        %v1752 = vld [vmem:[#allocation2 + $0x40] sm:$0xff]
        %v1753 = vld [vmem:[#allocation2 + $0x48] sm:$0xff]
        %v1754 = vld [vmem:[#allocation2 + $0x50] sm:$0xff]
        %v1755 = vld [vmem:[#allocation2 + $0x58] sm:$0xff]
        %v1756 = vld [vmem:[#allocation2 + $0x60] sm:$0xff]
        %v1757 = vld [vmem:[#allocation2 + $0x68] sm:$0xff]
        %v1758 = vld [vmem:[#allocation2 + $0x70] sm:$0xff]
        %v1759 = vld [vmem:[#allocation2 + $0x78] sm:$0xff]
        %v1760 = vld [vmem:[#allocation2 + $0x80] sm:$0xff]
        %v1761 = vld [vmem:[#allocation2 + $0x88] sm:$0xff]
        %v1762 = vld [vmem:[#allocation2 + $0x90] sm:$0xff]
        %v1763 = vld [vmem:[#allocation2 + $0x98] sm:$0xff]
        %v1764 = vld [vmem:[#allocation2 + $0xa0] sm:$0xff]
        %v1765 = vld [vmem:[#allocation2 + $0xa8] sm:$0xff]
        %v1766 = vld [vmem:[#allocation2 + $0xb0] sm:$0xff]
        %v1767 = vld [vmem:[#allocation2 + $0xb8] sm:$0xff]
        %v1768 = vld [vmem:[#allocation2 + $0xc0] sm:$0xff]
        %v1769 = vld [vmem:[#allocation2 + $0xc8] sm:$0xff]
        %v1770 = vld [vmem:[#allocation2 + $0xd0] sm:$0xff]
        %v1771 = vld [vmem:[#allocation2 + $0xd8] sm:$0xff]
        %v1772 = vld [vmem:[#allocation2 + $0xe0] sm:$0xff]
        %v1773 = vld [vmem:[#allocation2 + $0xe8] sm:$0xff]
        %v1774 = vld [vmem:[#allocation2 + $0xf0] sm:$0xff]
        %v1775 = vld [vmem:[#allocation2 + $0xf8] sm:$0xff]
        %v1776 = vld [vmem:[#allocation2 + $0x100] sm:$0xff]
        %v1777 = vld [vmem:[#allocation2 + $0x108] sm:$0xff]
        %v1778 = vld [vmem:[#allocation2 + $0x110] sm:$0xff]
        %v1779 = vld [vmem:[#allocation2 + $0x118] sm:$0xff]
        %v1780 = vld [vmem:[#allocation2 + $0x120] sm:$0xff]
        %v1781 = vld [vmem:[#allocation2 + $0x128] sm:$0xff]
        %v1782 = vld [vmem:[#allocation2 + $0x130] sm:$0xff]
        %v1783 = vld [vmem:[#allocation2 + $0x138] sm:$0xff]
        %v1784 = vld [vmem:[#allocation2 + $0x140] sm:$0xff]
        %v1785 = vld [vmem:[#allocation2 + $0x148] sm:$0xff]
        %v1786 = vld [vmem:[#allocation2 + $0x150] sm:$0xff]
        %v1787 = vld [vmem:[#allocation2 + $0x158] sm:$0xff]
        %v1788 = vld [vmem:[#allocation2 + $0x160] sm:$0xff]
        %v1789 = vld [vmem:[#allocation2 + $0x168] sm:$0xff]
        %v1790 = vld [vmem:[#allocation2 + $0x170] sm:$0xff]
        %v1791 = vld [vmem:[#allocation2 + $0x178] sm:$0xff]
        %v1792 = vld [vmem:[#allocation2 + $0x180] sm:$0xff]
        %v1793 = vld [vmem:[#allocation2 + $0x188] sm:$0xff]
        %v1794 = vld [vmem:[#allocation2 + $0x190] sm:$0xff]
        %v1795 = vld [vmem:[#allocation2 + $0x198] sm:$0xff]
        %v1796 = vld [vmem:[#allocation2 + $0x1a0] sm:$0xff]
        %v1797 = vld [vmem:[#allocation2 + $0x1a8] sm:$0xff]
        %v1798 = vld [vmem:[#allocation2 + $0x1b0] sm:$0xff]
        %v1799 = vld [vmem:[#allocation2 + $0x1b8] sm:$0xff]
        %v1800 = vld [vmem:[#allocation2 + $0x1c0] sm:$0xff]
        %v1801 = vld [vmem:[#allocation2 + $0x1c8] sm:$0xff]
        %v1802 = vld [vmem:[#allocation2 + $0x1d0] sm:$0xff]
        %v1803 = vld [vmem:[#allocation2 + $0x1d8] sm:$0xff]
        %v1804 = vld [vmem:[#allocation2 + $0x1e0] sm:$0xff]
        %v1805 = vld [vmem:[#allocation2 + $0x1e8] sm:$0xff]
        %v1806 = vld [vmem:[#allocation2 + $0x1f0] sm:$0xff]
        %v1807 = vld [vmem:[#allocation2 + $0x1f8] sm:$0xff]
        %v1808 = vld [vmem:[#allocation2 + $0x200] sm:$0xff]
        %v1809 = vld [vmem:[#allocation2 + $0x208] sm:$0xff]
        %v1810 = vld [vmem:[#allocation2 + $0x210] sm:$0xff]
        %v1811 = vld [vmem:[#allocation2 + $0x218] sm:$0xff]
        %v1812 = vld [vmem:[#allocation2 + $0x220] sm:$0xff]
        %v1813 = vld [vmem:[#allocation2 + $0x228] sm:$0xff]
        %v1814 = vld [vmem:[#allocation2 + $0x230] sm:$0xff]
        %v1815 = vld [vmem:[#allocation2 + $0x238] sm:$0xff]
        %v1816 = vld [vmem:[#allocation2 + $0x240] sm:$0xff]
        %v1817 = vld [vmem:[#allocation2 + $0x248] sm:$0xff]
        %v1818 = vld [vmem:[#allocation2 + $0x250] sm:$0xff]
        %v1819 = vld [vmem:[#allocation2 + $0x258] sm:$0xff]
        %v1820 = vld [vmem:[#allocation2 + $0x260] sm:$0xff]
        %v1821 = vld [vmem:[#allocation2 + $0x268] sm:$0xff]
        %v1822 = vld [vmem:[#allocation2 + $0x270] sm:$0xff]
        %v1823 = vld [vmem:[#allocation2 + $0x278] sm:$0xff]
        %v1824 = vld [vmem:[#allocation2 + $0x280] sm:$0xff]
        %v1825 = vld [vmem:[#allocation2 + $0x288] sm:$0xff]
        %v1826 = vld [vmem:[#allocation2 + $0x290] sm:$0xff]
        %v1827 = vld [vmem:[#allocation2 + $0x298] sm:$0xff]
        %v1828 = vld [vmem:[#allocation2 + $0x2a0] sm:$0xff]
        %v1829 = vld [vmem:[#allocation2 + $0x2a8] sm:$0xff]
        %v1830 = vld [vmem:[#allocation2 + $0x2b0] sm:$0xff]
        %v1831 = vld [vmem:[#allocation2 + $0x2b8] sm:$0xff]
        %v1832 = vld [vmem:[#allocation2 + $0x2c0] sm:$0xff]
        %v1833 = vld [vmem:[#allocation2 + $0x2c8] sm:$0xff]
        %v1834 = vld [vmem:[#allocation2 + $0x2d0] sm:$0xff]
        %v1835 = vld [vmem:[#allocation2 + $0x2d8] sm:$0xff]
        %v1836 = vld [vmem:[#allocation2 + $0x2e0] sm:$0xff]
        %v1837 = vld [vmem:[#allocation2 + $0x2e8] sm:$0xff]
        %v1838 = vld [vmem:[#allocation2 + $0x2f0] sm:$0xff]
        %v1839 = vld [vmem:[#allocation2 + $0x2f8] sm:$0xff]
        %v1840 = vld [vmem:[#allocation2 + $0x300] sm:$0xff]
        %v1841 = vld [vmem:[#allocation2 + $0x308] sm:$0xff]
        %v1842 = vld [vmem:[#allocation2 + $0x310] sm:$0xff]
        %v1843 = vld [vmem:[#allocation2 + $0x318] sm:$0xff]
        %v1844 = vld [vmem:[#allocation2 + $0x320] sm:$0xff]
        %v1845 = vld [vmem:[#allocation2 + $0x328] sm:$0xff]
        %v1846 = vld [vmem:[#allocation2 + $0x330] sm:$0xff]
        %v1847 = vld [vmem:[#allocation2 + $0x338] sm:$0xff]
        %v1848 = vld [vmem:[#allocation2 + $0x340] sm:$0xff]
        %v1849 = vld [vmem:[#allocation2 + $0x348] sm:$0xff]
        %v1850 = vld [vmem:[#allocation2 + $0x350] sm:$0xff]
        %v1851 = vld [vmem:[#allocation2 + $0x358] sm:$0xff]
        %v1852 = vld [vmem:[#allocation2 + $0x360] sm:$0xff]
        %v1853 = vld [vmem:[#allocation2 + $0x368] sm:$0xff]
        %v1854 = vld [vmem:[#allocation2 + $0x370] sm:$0xff]
        %v1855 = vld [vmem:[#allocation2 + $0x378] sm:$0xff]
        %v1856 = vld [vmem:[#allocation2 + $0x380] sm:$0xff]
        %v1857 = vld [vmem:[#allocation2 + $0x388] sm:$0xff]
        %v1858 = vld [vmem:[#allocation2 + $0x390] sm:$0xff]
        %v1859 = vld [vmem:[#allocation2 + $0x398] sm:$0xff]
        %v1860 = vld [vmem:[#allocation2 + $0x3a0] sm:$0xff]
        %v1861 = vld [vmem:[#allocation2 + $0x3a8] sm:$0xff]
        %v1862 = vld [vmem:[#allocation2 + $0x3b0] sm:$0xff]
        %v1863 = vld [vmem:[#allocation2 + $0x3b8] sm:$0xff]
        %v1864 = vld [vmem:[#allocation2 + $0x3c0] sm:$0xff]
        %v1865 = vld [vmem:[#allocation2 + $0x3c8] sm:$0xff]
        %v1866 = vld [vmem:[#allocation2 + $0x3d0] sm:$0xff]
        %v1867 = vld [vmem:[#allocation2 + $0x3d8] sm:$0xff]
        %v1868 = vld [vmem:[#allocation2 + $0x3e0] sm:$0xff]
        %v1869 = vld [vmem:[#allocation2 + $0x3e8] sm:$0xff]
        %v1870 = vld [vmem:[#allocation2 + $0x3f0] sm:$0xff]
        %v1871 = vld [vmem:[#allocation2 + $0x3f8] sm:$0xff]
        %v1880 = vunpack.c.l.b16 %v1736
        %v1881 = vunpack.c.h.b16 %v1736
        %v1882 = vunpack.c.l.b16 %v1737
        %v1883 = vunpack.c.h.b16 %v1737
        %v1884 = vunpack.c.l.b16 %v1738
        %v1885 = vunpack.c.h.b16 %v1738
        %v1886 = vunpack.c.l.b16 %v1739
        %v1887 = vunpack.c.h.b16 %v1739
        %v1888 = vunpack.c.l.b16 %v1740
        %v1889 = vunpack.c.h.b16 %v1740
        %v1890 = vunpack.c.l.b16 %v1741
        %v1891 = vunpack.c.h.b16 %v1741
        %v1892 = vunpack.c.l.b16 %v1742
        %v1893 = vunpack.c.h.b16 %v1742
        %v1894 = vunpack.c.l.b16 %v1743
        %v1895 = vunpack.c.h.b16 %v1743
        %v1896 = vpack.c.b16 %v1888, %v1880
        %v1897 = vpack.c.b16 %v1889, %v1881
        %v1898 = vpack.c.b16 %v1890, %v1882
        %v1899 = vpack.c.b16 %v1891, %v1883
        %v1900 = vpack.c.b16 %v1892, %v1884
        %v1901 = vpack.c.b16 %v1893, %v1885
        %v1902 = vpack.c.b16 %v1894, %v1886
        %v1903 = vpack.c.b16 %v1895, %v1887
        %v2040 = vunpack.c.l.b16 %v1744
        %v2041 = vunpack.c.h.b16 %v1744
        %v2042 = vunpack.c.l.b16 %v1745
        %v2043 = vunpack.c.h.b16 %v1745
        %v2044 = vunpack.c.l.b16 %v1746
        %v2045 = vunpack.c.h.b16 %v1746
        %v2046 = vunpack.c.l.b16 %v1747
        %v2047 = vunpack.c.h.b16 %v1747
        %v2048 = vunpack.c.l.b16 %v1748
        %v2049 = vunpack.c.h.b16 %v1748
        %v2050 = vunpack.c.l.b16 %v1749
        %v2051 = vunpack.c.h.b16 %v1749
        %v2052 = vunpack.c.l.b16 %v1750
        %v2053 = vunpack.c.h.b16 %v1750
        %v2054 = vunpack.c.l.b16 %v1751
        %v2055 = vunpack.c.h.b16 %v1751
        %v2056 = vunpack.c.l.b16 %v1752
        %v2057 = vunpack.c.h.b16 %v1752
        %v2058 = vunpack.c.l.b16 %v1753
        %v2059 = vunpack.c.h.b16 %v1753
        %v2060 = vunpack.c.l.b16 %v1754
        %v2061 = vunpack.c.h.b16 %v1754
        %v2062 = vunpack.c.l.b16 %v1755
        %v2063 = vunpack.c.h.b16 %v1755
        %v2064 = vunpack.c.l.b16 %v1756
        %v2065 = vunpack.c.h.b16 %v1756
        %v2066 = vunpack.c.l.b16 %v1757
        %v2067 = vunpack.c.h.b16 %v1757
        %v2068 = vunpack.c.l.b16 %v1758
        %v2069 = vunpack.c.h.b16 %v1758
        %v2070 = vunpack.c.l.b16 %v1759
        %v2071 = vunpack.c.h.b16 %v1759
        %v2072 = vunpack.c.l.b16 %v1760
        %v2073 = vunpack.c.h.b16 %v1760
        %v2074 = vunpack.c.l.b16 %v1761
        %v2075 = vunpack.c.h.b16 %v1761
        %v2076 = vunpack.c.l.b16 %v1762
        %v2077 = vunpack.c.h.b16 %v1762
        %v2078 = vunpack.c.l.b16 %v1763
        %v2079 = vunpack.c.h.b16 %v1763
        %v2080 = vunpack.c.l.b16 %v1764
        %v2081 = vunpack.c.h.b16 %v1764
        %v2082 = vunpack.c.l.b16 %v1765
        %v2083 = vunpack.c.h.b16 %v1765
        %v2084 = vunpack.c.l.b16 %v1766
        %v2085 = vunpack.c.h.b16 %v1766
        %v2086 = vunpack.c.l.b16 %v1767
        %v2087 = vunpack.c.h.b16 %v1767
        %v2088 = vunpack.c.l.b16 %v1768
        %v2089 = vunpack.c.h.b16 %v1768
        %v2090 = vunpack.c.l.b16 %v1769
        %v2091 = vunpack.c.h.b16 %v1769
        %v2092 = vunpack.c.l.b16 %v1770
        %v2093 = vunpack.c.h.b16 %v1770
        %v2094 = vunpack.c.l.b16 %v1771
        %v2095 = vunpack.c.h.b16 %v1771
        %v2096 = vunpack.c.l.b16 %v1772
        %v2097 = vunpack.c.h.b16 %v1772
        %v2098 = vunpack.c.l.b16 %v1773
        %v2099 = vunpack.c.h.b16 %v1773
        %v2100 = vunpack.c.l.b16 %v1774
        %v2101 = vunpack.c.h.b16 %v1774
        %v2102 = vunpack.c.l.b16 %v1775
        %v2103 = vunpack.c.h.b16 %v1775
        %v2104 = vunpack.c.l.b16 %v1776
        %v2105 = vunpack.c.h.b16 %v1776
        %v2106 = vunpack.c.l.b16 %v1777
        %v2107 = vunpack.c.h.b16 %v1777
        %v2108 = vunpack.c.l.b16 %v1778
        %v2109 = vunpack.c.h.b16 %v1778
        %v2110 = vunpack.c.l.b16 %v1779
        %v2111 = vunpack.c.h.b16 %v1779
        %v2112 = vunpack.c.l.b16 %v1780
        %v2113 = vunpack.c.h.b16 %v1780
        %v2114 = vunpack.c.l.b16 %v1781
        %v2115 = vunpack.c.h.b16 %v1781
        %v2116 = vunpack.c.l.b16 %v1782
        %v2117 = vunpack.c.h.b16 %v1782
        %v2118 = vunpack.c.l.b16 %v1783
        %v2119 = vunpack.c.h.b16 %v1783
        %v2120 = vunpack.c.l.b16 %v1784
        %v2121 = vunpack.c.h.b16 %v1784
        %v2122 = vunpack.c.l.b16 %v1785
        %v2123 = vunpack.c.h.b16 %v1785
        %v2124 = vunpack.c.l.b16 %v1786
        %v2125 = vunpack.c.h.b16 %v1786
        %v2126 = vunpack.c.l.b16 %v1787
        %v2127 = vunpack.c.h.b16 %v1787
        %v2128 = vunpack.c.l.b16 %v1788
        %v2129 = vunpack.c.h.b16 %v1788
        %v2130 = vunpack.c.l.b16 %v1789
        %v2131 = vunpack.c.h.b16 %v1789
        %v2132 = vunpack.c.l.b16 %v1790
        %v2133 = vunpack.c.h.b16 %v1790
        %v2134 = vunpack.c.l.b16 %v1791
        %v2135 = vunpack.c.h.b16 %v1791
        %v2136 = vunpack.c.l.b16 %v1792
        %v2137 = vunpack.c.h.b16 %v1792
        %v2138 = vunpack.c.l.b16 %v1793
        %v2139 = vunpack.c.h.b16 %v1793
        %v2140 = vunpack.c.l.b16 %v1794
        %v2141 = vunpack.c.h.b16 %v1794
        %v2142 = vunpack.c.l.b16 %v1795
        %v2143 = vunpack.c.h.b16 %v1795
        %v2144 = vunpack.c.l.b16 %v1796
        %v2145 = vunpack.c.h.b16 %v1796
        %v2146 = vunpack.c.l.b16 %v1797
        %v2147 = vunpack.c.h.b16 %v1797
        %v2148 = vunpack.c.l.b16 %v1798
        %v2149 = vunpack.c.h.b16 %v1798
        %v2150 = vunpack.c.l.b16 %v1799
        %v2151 = vunpack.c.h.b16 %v1799
        %v2152 = vunpack.c.l.b16 %v1800
        %v2153 = vunpack.c.h.b16 %v1800
        %v2154 = vunpack.c.l.b16 %v1801
        %v2155 = vunpack.c.h.b16 %v1801
        %v2156 = vunpack.c.l.b16 %v1802
        %v2157 = vunpack.c.h.b16 %v1802
        %v2158 = vunpack.c.l.b16 %v1803
        %v2159 = vunpack.c.h.b16 %v1803
        %v2160 = vunpack.c.l.b16 %v1804
        %v2161 = vunpack.c.h.b16 %v1804
        %v2162 = vunpack.c.l.b16 %v1805
        %v2163 = vunpack.c.h.b16 %v1805
        %v2164 = vunpack.c.l.b16 %v1806
        %v2165 = vunpack.c.h.b16 %v1806
        %v2166 = vunpack.c.l.b16 %v1807
        %v2167 = vunpack.c.h.b16 %v1807
        %v2168 = vunpack.c.l.b16 %v1808
        %v2169 = vunpack.c.h.b16 %v1808
        %v2170 = vunpack.c.l.b16 %v1809
        %v2171 = vunpack.c.h.b16 %v1809
        %v2172 = vunpack.c.l.b16 %v1810
        %v2173 = vunpack.c.h.b16 %v1810
        %v2174 = vunpack.c.l.b16 %v1811
        %v2175 = vunpack.c.h.b16 %v1811
        %v2176 = vunpack.c.l.b16 %v1812
        %v2177 = vunpack.c.h.b16 %v1812
        %v2178 = vunpack.c.l.b16 %v1813
        %v2179 = vunpack.c.h.b16 %v1813
        %v2180 = vunpack.c.l.b16 %v1814
        %v2181 = vunpack.c.h.b16 %v1814
        %v2182 = vunpack.c.l.b16 %v1815
        %v2183 = vunpack.c.h.b16 %v1815
        %v2184 = vunpack.c.l.b16 %v1816
        %v2185 = vunpack.c.h.b16 %v1816
        %v2186 = vunpack.c.l.b16 %v1817
        %v2187 = vunpack.c.h.b16 %v1817
        %v2188 = vunpack.c.l.b16 %v1818
        %v2189 = vunpack.c.h.b16 %v1818
        %v2190 = vunpack.c.l.b16 %v1819
        %v2191 = vunpack.c.h.b16 %v1819
        %v2192 = vunpack.c.l.b16 %v1820
        %v2193 = vunpack.c.h.b16 %v1820
        %v2194 = vunpack.c.l.b16 %v1821
        %v2195 = vunpack.c.h.b16 %v1821
        %v2196 = vunpack.c.l.b16 %v1822
        %v2197 = vunpack.c.h.b16 %v1822
        %v2198 = vunpack.c.l.b16 %v1823
        %v2199 = vunpack.c.h.b16 %v1823
        %v2200 = vunpack.c.l.b16 %v1824
        %v2201 = vunpack.c.h.b16 %v1824
        %v2202 = vunpack.c.l.b16 %v1825
        %v2203 = vunpack.c.h.b16 %v1825
        %v2204 = vunpack.c.l.b16 %v1826
        %v2205 = vunpack.c.h.b16 %v1826
        %v2206 = vunpack.c.l.b16 %v1827
        %v2207 = vunpack.c.h.b16 %v1827
        %v2208 = vunpack.c.l.b16 %v1828
        %v2209 = vunpack.c.h.b16 %v1828
        %v2210 = vunpack.c.l.b16 %v1829
        %v2211 = vunpack.c.h.b16 %v1829
        %v2212 = vunpack.c.l.b16 %v1830
        %v2213 = vunpack.c.h.b16 %v1830
        %v2214 = vunpack.c.l.b16 %v1831
        %v2215 = vunpack.c.h.b16 %v1831
        %v2216 = vunpack.c.l.b16 %v1832
        %v2217 = vunpack.c.h.b16 %v1832
        %v2218 = vunpack.c.l.b16 %v1833
        %v2219 = vunpack.c.h.b16 %v1833
        %v2220 = vunpack.c.l.b16 %v1834
        %v2221 = vunpack.c.h.b16 %v1834
        %v2222 = vunpack.c.l.b16 %v1835
        %v2223 = vunpack.c.h.b16 %v1835
        %v2224 = vunpack.c.l.b16 %v1836
        %v2225 = vunpack.c.h.b16 %v1836
        %v2226 = vunpack.c.l.b16 %v1837
        %v2227 = vunpack.c.h.b16 %v1837
        %v2228 = vunpack.c.l.b16 %v1838
        %v2229 = vunpack.c.h.b16 %v1838
        %v2230 = vunpack.c.l.b16 %v1839
        %v2231 = vunpack.c.h.b16 %v1839
        %v2232 = vunpack.c.l.b16 %v1840
        %v2233 = vunpack.c.h.b16 %v1840
        %v2234 = vunpack.c.l.b16 %v1841
        %v2235 = vunpack.c.h.b16 %v1841
        %v2236 = vunpack.c.l.b16 %v1842
        %v2237 = vunpack.c.h.b16 %v1842
        %v2238 = vunpack.c.l.b16 %v1843
        %v2239 = vunpack.c.h.b16 %v1843
        %v2240 = vunpack.c.l.b16 %v1844
        %v2241 = vunpack.c.h.b16 %v1844
        %v2242 = vunpack.c.l.b16 %v1845
        %v2243 = vunpack.c.h.b16 %v1845
        %v2244 = vunpack.c.l.b16 %v1846
        %v2245 = vunpack.c.h.b16 %v1846
        %v2246 = vunpack.c.l.b16 %v1847
        %v2247 = vunpack.c.h.b16 %v1847
        %v2248 = vunpack.c.l.b16 %v1848
        %v2249 = vunpack.c.h.b16 %v1848
        %v2250 = vunpack.c.l.b16 %v1849
        %v2251 = vunpack.c.h.b16 %v1849
        %v2252 = vunpack.c.l.b16 %v1850
        %v2253 = vunpack.c.h.b16 %v1850
        %v2254 = vunpack.c.l.b16 %v1851
        %v2255 = vunpack.c.h.b16 %v1851
        %v2256 = vunpack.c.l.b16 %v1852
        %v2257 = vunpack.c.h.b16 %v1852
        %v2258 = vunpack.c.l.b16 %v1853
        %v2259 = vunpack.c.h.b16 %v1853
        %v2260 = vunpack.c.l.b16 %v1854
        %v2261 = vunpack.c.h.b16 %v1854
        %v2262 = vunpack.c.l.b16 %v1855
        %v2263 = vunpack.c.h.b16 %v1855
        %v2264 = vunpack.c.l.b16 %v1856
        %v2265 = vunpack.c.h.b16 %v1856
        %v2266 = vunpack.c.l.b16 %v1857
        %v2267 = vunpack.c.h.b16 %v1857
        %v2268 = vunpack.c.l.b16 %v1858
        %v2269 = vunpack.c.h.b16 %v1858
        %v2270 = vunpack.c.l.b16 %v1859
        %v2271 = vunpack.c.h.b16 %v1859
        %v2272 = vunpack.c.l.b16 %v1860
        %v2273 = vunpack.c.h.b16 %v1860
        %v2274 = vunpack.c.l.b16 %v1861
        %v2275 = vunpack.c.h.b16 %v1861
        %v2276 = vunpack.c.l.b16 %v1862
        %v2277 = vunpack.c.h.b16 %v1862
        %v2278 = vunpack.c.l.b16 %v1863
        %v2279 = vunpack.c.h.b16 %v1863
        %v2280 = vunpack.c.l.b16 %v1864
        %v2281 = vunpack.c.h.b16 %v1864
        %v2282 = vunpack.c.l.b16 %v1865
        %v2283 = vunpack.c.h.b16 %v1865
        %v2284 = vunpack.c.l.b16 %v1866
        %v2285 = vunpack.c.h.b16 %v1866
        %v2286 = vunpack.c.l.b16 %v1867
        %v2287 = vunpack.c.h.b16 %v1867
        %v2288 = vunpack.c.l.b16 %v1868
        %v2289 = vunpack.c.h.b16 %v1868
        %v2290 = vunpack.c.l.b16 %v1869
        %v2291 = vunpack.c.h.b16 %v1869
        %v2292 = vunpack.c.l.b16 %v1870
        %v2293 = vunpack.c.h.b16 %v1870
        %v2294 = vunpack.c.l.b16 %v1871
        %v2295 = vunpack.c.h.b16 %v1871
        %v2296 = vpack.c.b16 %v2042, %v2040
        %v2297 = vpack.c.b16 %v2043, %v2041
        %v2298 = vpack.c.b16 %v2046, %v2044
        %v2299 = vpack.c.b16 %v2047, %v2045
        %v2300 = vpack.c.b16 %v2050, %v2048
        %v2301 = vpack.c.b16 %v2051, %v2049
        %v2302 = vpack.c.b16 %v2054, %v2052
        %v2303 = vpack.c.b16 %v2055, %v2053
        %v2304 = vpack.c.b16 %v2058, %v2056
        %v2305 = vpack.c.b16 %v2059, %v2057
        %v2306 = vpack.c.b16 %v2062, %v2060
        %v2307 = vpack.c.b16 %v2063, %v2061
        %v2308 = vpack.c.b16 %v2066, %v2064
        %v2309 = vpack.c.b16 %v2067, %v2065
        %v2310 = vpack.c.b16 %v2070, %v2068
        %v2311 = vpack.c.b16 %v2071, %v2069
        %v2312 = vpack.c.b16 %v2074, %v2072
        %v2313 = vpack.c.b16 %v2075, %v2073
        %v2314 = vpack.c.b16 %v2078, %v2076
        %v2315 = vpack.c.b16 %v2079, %v2077
        %v2316 = vpack.c.b16 %v2082, %v2080
        %v2317 = vpack.c.b16 %v2083, %v2081
        %v2318 = vpack.c.b16 %v2086, %v2084
        %v2319 = vpack.c.b16 %v2087, %v2085
        %v2320 = vpack.c.b16 %v2090, %v2088
        %v2321 = vpack.c.b16 %v2091, %v2089
        %v2322 = vpack.c.b16 %v2094, %v2092
        %v2323 = vpack.c.b16 %v2095, %v2093
        %v2324 = vpack.c.b16 %v2098, %v2096
        %v2325 = vpack.c.b16 %v2099, %v2097
        %v2326 = vpack.c.b16 %v2102, %v2100
        %v2327 = vpack.c.b16 %v2103, %v2101
        %v2328 = vpack.c.b16 %v2106, %v2104
        %v2329 = vpack.c.b16 %v2107, %v2105
        %v2330 = vpack.c.b16 %v2110, %v2108
        %v2331 = vpack.c.b16 %v2111, %v2109
        %v2332 = vpack.c.b16 %v2114, %v2112
        %v2333 = vpack.c.b16 %v2115, %v2113
        %v2334 = vpack.c.b16 %v2118, %v2116
        %v2335 = vpack.c.b16 %v2119, %v2117
        %v2336 = vpack.c.b16 %v2122, %v2120
        %v2337 = vpack.c.b16 %v2123, %v2121
        %v2338 = vpack.c.b16 %v2126, %v2124
        %v2339 = vpack.c.b16 %v2127, %v2125
        %v2340 = vpack.c.b16 %v2130, %v2128
        %v2341 = vpack.c.b16 %v2131, %v2129
        %v2342 = vpack.c.b16 %v2134, %v2132
        %v2343 = vpack.c.b16 %v2135, %v2133
        %v2344 = vpack.c.b16 %v2138, %v2136
        %v2345 = vpack.c.b16 %v2139, %v2137
        %v2346 = vpack.c.b16 %v2142, %v2140
        %v2347 = vpack.c.b16 %v2143, %v2141
        %v2348 = vpack.c.b16 %v2146, %v2144
        %v2349 = vpack.c.b16 %v2147, %v2145
        %v2350 = vpack.c.b16 %v2150, %v2148
        %v2351 = vpack.c.b16 %v2151, %v2149
        %v2352 = vpack.c.b16 %v2154, %v2152
        %v2353 = vpack.c.b16 %v2155, %v2153
        %v2354 = vpack.c.b16 %v2158, %v2156
        %v2355 = vpack.c.b16 %v2159, %v2157
        %v2356 = vpack.c.b16 %v2162, %v2160
        %v2357 = vpack.c.b16 %v2163, %v2161
        %v2358 = vpack.c.b16 %v2166, %v2164
        %v2359 = vpack.c.b16 %v2167, %v2165
        %v2360 = vpack.c.b16 %v2170, %v2168
        %v2361 = vpack.c.b16 %v2171, %v2169
        %v2362 = vpack.c.b16 %v2174, %v2172
        %v2363 = vpack.c.b16 %v2175, %v2173
        %v2364 = vpack.c.b16 %v2178, %v2176
        %v2365 = vpack.c.b16 %v2179, %v2177
        %v2366 = vpack.c.b16 %v2182, %v2180
        %v2367 = vpack.c.b16 %v2183, %v2181
        %v2368 = vpack.c.b16 %v2186, %v2184
        %v2369 = vpack.c.b16 %v2187, %v2185
        %v2370 = vpack.c.b16 %v2190, %v2188
        %v2371 = vpack.c.b16 %v2191, %v2189
        %v2372 = vpack.c.b16 %v2194, %v2192
        %v2373 = vpack.c.b16 %v2195, %v2193
        %v2374 = vpack.c.b16 %v2198, %v2196
        %v2375 = vpack.c.b16 %v2199, %v2197
        %v2376 = vpack.c.b16 %v2202, %v2200
        %v2377 = vpack.c.b16 %v2203, %v2201
        %v2378 = vpack.c.b16 %v2206, %v2204
        %v2379 = vpack.c.b16 %v2207, %v2205
        %v2380 = vpack.c.b16 %v2210, %v2208
        %v2381 = vpack.c.b16 %v2211, %v2209
        %v2382 = vpack.c.b16 %v2214, %v2212
        %v2383 = vpack.c.b16 %v2215, %v2213
        %v2384 = vpack.c.b16 %v2218, %v2216
        %v2385 = vpack.c.b16 %v2219, %v2217
        %v2386 = vpack.c.b16 %v2222, %v2220
        %v2387 = vpack.c.b16 %v2223, %v2221
        %v2388 = vpack.c.b16 %v2226, %v2224
        %v2389 = vpack.c.b16 %v2227, %v2225
        %v2390 = vpack.c.b16 %v2230, %v2228
        %v2391 = vpack.c.b16 %v2231, %v2229
        %v2392 = vpack.c.b16 %v2234, %v2232
        %v2393 = vpack.c.b16 %v2235, %v2233
        %v2394 = vpack.c.b16 %v2238, %v2236
        %v2395 = vpack.c.b16 %v2239, %v2237
        %v2396 = vpack.c.b16 %v2242, %v2240
        %v2397 = vpack.c.b16 %v2243, %v2241
        %v2398 = vpack.c.b16 %v2246, %v2244
        %v2399 = vpack.c.b16 %v2247, %v2245
        %v2400 = vpack.c.b16 %v2250, %v2248
        %v2401 = vpack.c.b16 %v2251, %v2249
        %v2402 = vpack.c.b16 %v2254, %v2252
        %v2403 = vpack.c.b16 %v2255, %v2253
        %v2404 = vpack.c.b16 %v2258, %v2256
        %v2405 = vpack.c.b16 %v2259, %v2257
        %v2406 = vpack.c.b16 %v2262, %v2260
        %v2407 = vpack.c.b16 %v2263, %v2261
        %v2408 = vpack.c.b16 %v2266, %v2264
        %v2409 = vpack.c.b16 %v2267, %v2265
        %v2410 = vpack.c.b16 %v2270, %v2268
        %v2411 = vpack.c.b16 %v2271, %v2269
        %v2412 = vpack.c.b16 %v2274, %v2272
        %v2413 = vpack.c.b16 %v2275, %v2273
        %v2414 = vpack.c.b16 %v2278, %v2276
        %v2415 = vpack.c.b16 %v2279, %v2277
        %v2416 = vpack.c.b16 %v2282, %v2280
        %v2417 = vpack.c.b16 %v2283, %v2281
        %v2418 = vpack.c.b16 %v2286, %v2284
        %v2419 = vpack.c.b16 %v2287, %v2285
        %v2420 = vpack.c.b16 %v2290, %v2288
        %v2421 = vpack.c.b16 %v2291, %v2289
        %v2422 = vpack.c.b16 %v2294, %v2292
        %v2423 = vpack.c.b16 %v2295, %v2293
        %2552 = vmatpush.bf16.msra.mxu0 %v2310
        %2553 = vmatpush.bf16.msra.mxu0 %v2308
        %2554 = vmatpush.bf16.msra.mxu0 %v2306
        %2555 = vmatpush.bf16.msra.mxu0 %v2304
        %2556 = vmatpush.bf16.msra.mxu0 %v2302
        %2557 = vmatpush.bf16.msra.mxu0 %v2300
        %2558 = vmatpush.bf16.msra.mxu0 %v2298
        %2559 = vmatpush.bf16.msra.mxu0 %v2296
        %2560 = vmatmul.bf16.gmra.mxu0 %v1896
        %v2561 = vpop.f32.mrf.mxu0
        %v2562 = vadd.f32 0.0, %v2561
        %v2563 = vpop.f32.mrf.mxu0
        %v2564 = vadd.f32 0.0, %v2563
        %2565 = vdwg.mxu0
        %2566 = vmatpush.bf16.msra.mxu0 %v2326
        %2567 = vmatpush.bf16.msra.mxu0 %v2324
        %2568 = vmatpush.bf16.msra.mxu0 %v2322
        %2569 = vmatpush.bf16.msra.mxu0 %v2320
        %2570 = vmatpush.bf16.msra.mxu0 %v2318
        %2571 = vmatpush.bf16.msra.mxu0 %v2316
        %2572 = vmatpush.bf16.msra.mxu0 %v2314
        %2573 = vmatpush.bf16.msra.mxu0 %v2312
        %2574 = vmatmul.bf16.gmra.mxu0 %v1897
        %v2575 = vpop.f32.mrf.mxu0
        %v2576 = vadd.f32 %v2562, %v2575
        %v2577 = vpop.f32.mrf.mxu0
        %v2578 = vadd.f32 %v2564, %v2577
        %2579 = vdwg.mxu0
        %2580 = vmatpush.bf16.msra.mxu0 %v2342
        %2581 = vmatpush.bf16.msra.mxu0 %v2340
        %2582 = vmatpush.bf16.msra.mxu0 %v2338
        %2583 = vmatpush.bf16.msra.mxu0 %v2336
        %2584 = vmatpush.bf16.msra.mxu0 %v2334
        %2585 = vmatpush.bf16.msra.mxu0 %v2332
        %2586 = vmatpush.bf16.msra.mxu0 %v2330
        %2587 = vmatpush.bf16.msra.mxu0 %v2328
        %2588 = vmatmul.bf16.gmra.mxu0 %v1898
        %v2589 = vpop.f32.mrf.mxu0
        %v2590 = vadd.f32 %v2576, %v2589
        %v2591 = vpop.f32.mrf.mxu0
        %v2592 = vadd.f32 %v2578, %v2591
        %2593 = vdwg.mxu0
        %2594 = vmatpush.bf16.msra.mxu0 %v2358
        %2595 = vmatpush.bf16.msra.mxu0 %v2356
        %2596 = vmatpush.bf16.msra.mxu0 %v2354
        %2597 = vmatpush.bf16.msra.mxu0 %v2352
        %2598 = vmatpush.bf16.msra.mxu0 %v2350
        %2599 = vmatpush.bf16.msra.mxu0 %v2348
        %2600 = vmatpush.bf16.msra.mxu0 %v2346
        %2601 = vmatpush.bf16.msra.mxu0 %v2344
        %2602 = vmatmul.bf16.gmra.mxu0 %v1899
        %v2603 = vpop.f32.mrf.mxu0
        %v2604 = vadd.f32 %v2590, %v2603
        %v2605 = vpop.f32.mrf.mxu0
        %v2606 = vadd.f32 %v2592, %v2605
        %2607 = vdwg.mxu0
        %2608 = vmatpush.bf16.msra.mxu0 %v2374
        %2609 = vmatpush.bf16.msra.mxu0 %v2372
        %2610 = vmatpush.bf16.msra.mxu0 %v2370
        %2611 = vmatpush.bf16.msra.mxu0 %v2368
        %2612 = vmatpush.bf16.msra.mxu0 %v2366
        %2613 = vmatpush.bf16.msra.mxu0 %v2364
        %2614 = vmatpush.bf16.msra.mxu0 %v2362
        %2615 = vmatpush.bf16.msra.mxu0 %v2360
        %2616 = vmatmul.bf16.gmra.mxu0 %v1900
        %v2617 = vpop.f32.mrf.mxu0
        %v2618 = vadd.f32 %v2604, %v2617
        %v2619 = vpop.f32.mrf.mxu0
        %v2620 = vadd.f32 %v2606, %v2619
        %2621 = vdwg.mxu0
        %2622 = vmatpush.bf16.msra.mxu0 %v2390
        %2623 = vmatpush.bf16.msra.mxu0 %v2388
        %2624 = vmatpush.bf16.msra.mxu0 %v2386
        %2625 = vmatpush.bf16.msra.mxu0 %v2384
        %2626 = vmatpush.bf16.msra.mxu0 %v2382
        %2627 = vmatpush.bf16.msra.mxu0 %v2380
        %2628 = vmatpush.bf16.msra.mxu0 %v2378
        %2629 = vmatpush.bf16.msra.mxu0 %v2376
        %2630 = vmatmul.bf16.gmra.mxu0 %v1901
        %v2631 = vpop.f32.mrf.mxu0
        %v2632 = vadd.f32 %v2618, %v2631
        %v2633 = vpop.f32.mrf.mxu0
        %v2634 = vadd.f32 %v2620, %v2633
        %2635 = vdwg.mxu0
        %2636 = vmatpush.bf16.msra.mxu0 %v2406
        %2637 = vmatpush.bf16.msra.mxu0 %v2404
        %2638 = vmatpush.bf16.msra.mxu0 %v2402
        %2639 = vmatpush.bf16.msra.mxu0 %v2400
        %2640 = vmatpush.bf16.msra.mxu0 %v2398
        %2641 = vmatpush.bf16.msra.mxu0 %v2396
        %2642 = vmatpush.bf16.msra.mxu0 %v2394
        %2643 = vmatpush.bf16.msra.mxu0 %v2392
        %2644 = vmatmul.bf16.gmra.mxu0 %v1902
        %v2645 = vpop.f32.mrf.mxu0
        %v2646 = vadd.f32 %v2632, %v2645
        %v2647 = vpop.f32.mrf.mxu0
        %v2648 = vadd.f32 %v2634, %v2647
        %2649 = vdwg.mxu0
        %2650 = vmatpush.bf16.msra.mxu0 %v2422
        %2651 = vmatpush.bf16.msra.mxu0 %v2420
        %2652 = vmatpush.bf16.msra.mxu0 %v2418
        %2653 = vmatpush.bf16.msra.mxu0 %v2416
        %2654 = vmatpush.bf16.msra.mxu0 %v2414
        %2655 = vmatpush.bf16.msra.mxu0 %v2412
        %2656 = vmatpush.bf16.msra.mxu0 %v2410
        %2657 = vmatpush.bf16.msra.mxu0 %v2408
        %2658 = vmatmul.bf16.gmra.mxu0 %v1903
        %v2659 = vpop.f32.mrf.mxu0
        %v2660 = vadd.f32 %v2646, %v2659
        %v2661 = vpop.f32.mrf.mxu0
        %v2662 = vadd.f32 %v2648, %v2661
        %2663 = vdwg.mxu0
        %2664 = vmatpush.bf16.msra.mxu0 %v2311
        %2665 = vmatpush.bf16.msra.mxu0 %v2309
        %2666 = vmatpush.bf16.msra.mxu0 %v2307
        %2667 = vmatpush.bf16.msra.mxu0 %v2305
        %2668 = vmatpush.bf16.msra.mxu0 %v2303
        %2669 = vmatpush.bf16.msra.mxu0 %v2301
        %2670 = vmatpush.bf16.msra.mxu0 %v2299
        %2671 = vmatpush.bf16.msra.mxu0 %v2297
        %2672 = vmatmul.bf16.gmra.mxu0 %v1896
        %v2673 = vpop.f32.mrf.mxu0
        %v2674 = vadd.f32 0.0, %v2673
        %v2675 = vpop.f32.mrf.mxu0
        %v2676 = vadd.f32 0.0, %v2675
        %2677 = vdwg.mxu0
        %2678 = vmatpush.bf16.msra.mxu0 %v2327
        %2679 = vmatpush.bf16.msra.mxu0 %v2325
        %2680 = vmatpush.bf16.msra.mxu0 %v2323
        %2681 = vmatpush.bf16.msra.mxu0 %v2321
        %2682 = vmatpush.bf16.msra.mxu0 %v2319
        %2683 = vmatpush.bf16.msra.mxu0 %v2317
        %2684 = vmatpush.bf16.msra.mxu0 %v2315
        %2685 = vmatpush.bf16.msra.mxu0 %v2313
        %2686 = vmatmul.bf16.gmra.mxu0 %v1897
        %v2687 = vpop.f32.mrf.mxu0
        %v2688 = vadd.f32 %v2674, %v2687
        %v2689 = vpop.f32.mrf.mxu0
        %v2690 = vadd.f32 %v2676, %v2689
        %2691 = vdwg.mxu0
        %2692 = vmatpush.bf16.msra.mxu0 %v2343
        %2693 = vmatpush.bf16.msra.mxu0 %v2341
        %2694 = vmatpush.bf16.msra.mxu0 %v2339
        %2695 = vmatpush.bf16.msra.mxu0 %v2337
        %2696 = vmatpush.bf16.msra.mxu0 %v2335
        %2697 = vmatpush.bf16.msra.mxu0 %v2333
        %2698 = vmatpush.bf16.msra.mxu0 %v2331
        %2699 = vmatpush.bf16.msra.mxu0 %v2329
        %2700 = vmatmul.bf16.gmra.mxu0 %v1898
        %v2701 = vpop.f32.mrf.mxu0
        %v2702 = vadd.f32 %v2688, %v2701
        %v2703 = vpop.f32.mrf.mxu0
        %v2704 = vadd.f32 %v2690, %v2703
        %2705 = vdwg.mxu0
        %2706 = vmatpush.bf16.msra.mxu0 %v2359
        %2707 = vmatpush.bf16.msra.mxu0 %v2357
        %2708 = vmatpush.bf16.msra.mxu0 %v2355
        %2709 = vmatpush.bf16.msra.mxu0 %v2353
        %2710 = vmatpush.bf16.msra.mxu0 %v2351
        %2711 = vmatpush.bf16.msra.mxu0 %v2349
        %2712 = vmatpush.bf16.msra.mxu0 %v2347
        %2713 = vmatpush.bf16.msra.mxu0 %v2345
        %2714 = vmatmul.bf16.gmra.mxu0 %v1899
        %v2715 = vpop.f32.mrf.mxu0
        %v2716 = vadd.f32 %v2702, %v2715
        %v2717 = vpop.f32.mrf.mxu0
        %v2718 = vadd.f32 %v2704, %v2717
        %2719 = vdwg.mxu0
        %2720 = vmatpush.bf16.msra.mxu0 %v2375
        %2721 = vmatpush.bf16.msra.mxu0 %v2373
        %2722 = vmatpush.bf16.msra.mxu0 %v2371
        %2723 = vmatpush.bf16.msra.mxu0 %v2369
        %2724 = vmatpush.bf16.msra.mxu0 %v2367
        %2725 = vmatpush.bf16.msra.mxu0 %v2365
        %2726 = vmatpush.bf16.msra.mxu0 %v2363
        %2727 = vmatpush.bf16.msra.mxu0 %v2361
        %2728 = vmatmul.bf16.gmra.mxu0 %v1900
        %v2729 = vpop.f32.mrf.mxu0
        %v2730 = vadd.f32 %v2716, %v2729
        %v2731 = vpop.f32.mrf.mxu0
        %v2732 = vadd.f32 %v2718, %v2731
        %2733 = vdwg.mxu0
        %2734 = vmatpush.bf16.msra.mxu0 %v2391
        %2735 = vmatpush.bf16.msra.mxu0 %v2389
        %2736 = vmatpush.bf16.msra.mxu0 %v2387
        %2737 = vmatpush.bf16.msra.mxu0 %v2385
        %2738 = vmatpush.bf16.msra.mxu0 %v2383
        %2739 = vmatpush.bf16.msra.mxu0 %v2381
        %2740 = vmatpush.bf16.msra.mxu0 %v2379
        %2741 = vmatpush.bf16.msra.mxu0 %v2377
        %2742 = vmatmul.bf16.gmra.mxu0 %v1901
        %v2743 = vpop.f32.mrf.mxu0
        %v2744 = vadd.f32 %v2730, %v2743
        %v2745 = vpop.f32.mrf.mxu0
        %v2746 = vadd.f32 %v2732, %v2745
        %2747 = vdwg.mxu0
        %2748 = vmatpush.bf16.msra.mxu0 %v2407
        %2749 = vmatpush.bf16.msra.mxu0 %v2405
        %2750 = vmatpush.bf16.msra.mxu0 %v2403
        %2751 = vmatpush.bf16.msra.mxu0 %v2401
        %2752 = vmatpush.bf16.msra.mxu0 %v2399
        %2753 = vmatpush.bf16.msra.mxu0 %v2397
        %2754 = vmatpush.bf16.msra.mxu0 %v2395
        %2755 = vmatpush.bf16.msra.mxu0 %v2393
        %2756 = vmatmul.bf16.gmra.mxu0 %v1902
        %v2757 = vpop.f32.mrf.mxu0
        %v2758 = vadd.f32 %v2744, %v2757
        %v2759 = vpop.f32.mrf.mxu0
        %v2760 = vadd.f32 %v2746, %v2759
        %2761 = vdwg.mxu0
        %2762 = vmatpush.bf16.msra.mxu0 %v2423
        %2763 = vmatpush.bf16.msra.mxu0 %v2421
        %2764 = vmatpush.bf16.msra.mxu0 %v2419
        %2765 = vmatpush.bf16.msra.mxu0 %v2417
        %2766 = vmatpush.bf16.msra.mxu0 %v2415
        %2767 = vmatpush.bf16.msra.mxu0 %v2413
        %2768 = vmatpush.bf16.msra.mxu0 %v2411
        %2769 = vmatpush.bf16.msra.mxu0 %v2409
        %2770 = vmatmul.bf16.gmra.mxu0 %v1903
        %v2771 = vpop.f32.mrf.mxu0
        %v2772 = vadd.f32 %v2758, %v2771
        %v2773 = vpop.f32.mrf.mxu0
        %v2774 = vadd.f32 %v2760, %v2773
        %2775 = vdwg.mxu0
        %v2776 = vadd.f32 %v1732, %v2660
        %v2777 = vadd.f32 %v1733, %v2772
        %v2778 = vadd.f32 %v1734, %v2662
        %v2779 = vadd.f32 %v1735, %v2774
        %2780 = vst [vmem:[#allocation3] sm:$0xff] %v2776
        %2781 = vst [vmem:[#allocation3 + $0x8] sm:$0xff] %v2777
        %2782 = vst [vmem:[#allocation3 + $0x10] sm:$0xff] %v2778
        %2783 = vst [vmem:[#allocation3 + $0x18] sm:$0xff] %v2779
        // Predicated region
        $region65: #{tpu_custom_call.1} parent=43 // pred_check
          %p2784 = pneg %p462
        $region66: #{tpu_custom_call.1} parent=43 // pred_check_branch
          %2786 = sbr.rel (%p2784) target = $region68
        $region67: #{tpu_custom_call.1} parent=43 // pred_region
          %v2787 = vld [vmem:[#allocation3] sm:$0xff]
          %v2788 = vld [vmem:[#allocation3 + $0x8] sm:$0xff]
          %v2789 = vld [vmem:[#allocation3 + $0x10] sm:$0xff]
          %v2790 = vld [vmem:[#allocation3 + $0x18] sm:$0xff]
          %v2791 = vld [vmem:[%s453] sm:$0xff]
          %v2792 = vld [vmem:[%s453 + $0x8] sm:$0xff]
          %2794 = vset.pattern.permute.xlu0 0
          %2795 = vperm.xlu0 %2794, %v2791
          %v2796 = vpop.permute.xlu0 %2795
          %2799 = vset.pattern.permute.xlu0 0
          %2800 = vperm.xlu0 %2799, %v2792
          %v2801 = vpop.permute.xlu0 %2800
          %v2803 = vmul.f32 %v2787, %v2796
          %v2804 = vmul.f32 %v2788, %v2796
          %v2805 = vmul.f32 %v2789, %v2801
          %v2806 = vmul.f32 %v2790, %v2801
          %v2807 = vld [vmem:[%s458] sm:$0x3]
          %v2809 = vperm.slane %v2807, 0
          %v2810 = vperm.slane %v2807, 1
          %v2813 = vadd.f32 %v2803, %v2809
          %v2814 = vadd.f32 %v2804, %v2810
          %v2815 = vadd.f32 %v2805, %v2809
          %v2816 = vadd.f32 %v2806, %v2810
          %v2817 = vpack.c.bf16 %v2814, %v2813
          %v2818 = vpack.c.bf16 %v2816, %v2815
          %2819 = vst [vmem:[%s442] sm:$0xff] %v2817
          %2820 = vst [vmem:[%s442 + $0x8] sm:$0xff] %v2818
        $region68: #{tpu_custom_call.1} parent=43 // pred_fallthru
          _
        %s2821 = sand.u32 %s220, 1
        %s2822 = scalar_lea.sflag [#allocation6], %s2821
        %s2823 = sand.u32 %s220, 1
        %s2824 = smul.addr %s2823, 16
        %s2825 = scalar_lea.vmem [#allocation12], %s2824
        // Predicated region
        $region69: #{tpu_custom_call.1} parent=43 // pred_check
          %p2826 = pneg %p230
        $region70: #{tpu_custom_call.1} parent=43 // pred_check_branch
          %2828 = sbr.rel (%p2826) target = $region72
        $region71: #{tpu_custom_call.1} parent=43 // pred_region
          %s2829 = smul.u32 2, %s32
          %s2830 = smul.u32 2, %s33
          %2832 = vsyncadd %s2822, 0
          %s2833 = smul.addr %s2829, 4
          %s2834 = sadd.s32 %s2830, %s2833
          %s2835 = smul.addr %s2834, 4
          %s2836 = scalar_lea.hbm %s6, %s2835
          %s2837 = sshll.u32 %s2825, 4
          %s2838 = int_to_ptr.vmem [resolvable:$true] %s2837
          %s2839 = sshll.u32 %s2836, 4
          %s2840 = int_to_ptr.hbm [resolvable:$true] %s2839
          %2845 = dma.vmem_to_hbm [thread:$0]  %s2838, 256, %s2840, %s2822, 128, 256, 8
        $region72: #{tpu_custom_call.1} parent=43 // pred_fallthru
          _
      $region44: #{tpu_custom_call.1} parent=5 // pred_fallthru
        _
      %p2846 = scmp.le.s32.totalorder 2, %s22
      // Predicated region
      $region73: #{tpu_custom_call.1} parent=5 // pred_check
        %p2847 = pneg %p2846
      $region74: #{tpu_custom_call.1} parent=5 // pred_check_branch
        %2849 = sbr.rel (%p2847) target = $region76
      $region75: #{tpu_custom_call.1} parent=5 // pred_region
        %s2850 = ssub.s32 %s22, 2
        // Predicated region
        $region77: #{tpu_custom_call.1} parent=75 // pred_check
          %p2851 = pneg %p236
        $region78: #{tpu_custom_call.1} parent=75 // pred_check_branch
          %2853 = sbr.rel (%p2851) target = $region80
        $region79: #{tpu_custom_call.1} parent=75 // pred_region
          %s2854 = sand.u32 %s221, 1
          %s2855 = scalar_lea.sflag [#allocation6], %s2854
          %s2856 = sand.u32 %s221, 1
          %s2857 = smul.addr %s2856, 16
          %s2858 = scalar_lea.vmem [#allocation12], %s2857
          %2860 = dma.done %s2855, 256
        $region80: #{tpu_custom_call.1} parent=75 // pred_fallthru
          _
      $region76: #{tpu_custom_call.1} parent=5 // pred_fallthru
        _
    $region6: #{tpu_custom_call.1} parent=1 // loop_footer
      %s26 = sadd.s32 1, %s22
    $region7: #{tpu_custom_call.1} parent=1 // loop_footer_branch
      %21 = sbr.rel target = $region3
    $region8: #{tpu_custom_call.1} parent=1 // loop_exit
      _
    %2861 = vsyncpa [#allocation5], 1
    %s2862 = scalar_lea.sflag [#allocation5], 1
    %2863 = vsyncpa %s2862, 1
    %2864 = vsyncpa [#allocation8], 1
    %s2865 = scalar_lea.sflag [#allocation8], 1
    %2866 = vsyncpa %s2865, 1
    %2867 = vsyncpa [#allocation11], 1
    %s2868 = scalar_lea.sflag [#allocation11], 1
    %2869 = vsyncpa %s2868, 1
    %2870 = vsyncpa [#allocation6], 1
    %s2871 = scalar_lea.sflag [#allocation6], 1
    %2872 = vsyncpa %s2871, 1

</llo_original>
